<compile_context>
chip_gen: v6e
topology: v6e:2x2x1
jax: 0.10.0
libtpu: 0.0.40
codegen_flags: <defaults>
</compile_context>

<pallas_src>
import functools
import math

import jax
import jax.numpy as jnp
from jax.experimental import pallas as pl
from jax.experimental.pallas import tpu as pltpu


def _round_up(x, m):
    return ((x + m - 1) // m) * m


_VMEM_LIMIT = 48 * 1024 * 1024  # safe on v5e/v6e (128 MiB) and v7x (64 MiB)


# ----------------------------------------------------------------------------
# Kernel 1: tiled dense matmul  C = A @ B  (used for torch.sparse.mm(G, X))
#   grid = (M/tm, K/tk), f32 VMEM accumulator, bf16 inputs, f32 accumulation.
# ----------------------------------------------------------------------------
def _matmul_kernel(a_ref, b_ref, o_ref, acc_ref):
    @pl.when(pl.program_id(1) == 0)
    def _():
        acc_ref[...] = jnp.zeros_like(acc_ref)

    acc_ref[...] += jnp.dot(a_ref[...], b_ref[...],
                            preferred_element_type=jnp.float32)

    @pl.when(pl.program_id(1) == pl.num_programs(1) - 1)
    def _():
        o_ref[...] = acc_ref[...].astype(o_ref.dtype)


def pallas_matmul(a, b, *, tile_m=512, tile_k=512, in_dtype=jnp.bfloat16):
    M, K = a.shape
    K2, N = b.shape
    assert K == K2

    if M <= tile_m:
        tm, Mp = M, M
    else:
        tm, Mp = tile_m, _round_up(M, tile_m)
    if K <= tile_k:
        tk, Kp = K, K
    else:
        tk, Kp = tile_k, _round_up(K, tile_k)

    a_p = a.astype(in_dtype)
    b_p = b.astype(in_dtype)
    if (Mp, Kp) != (M, K):
        a_p = jnp.pad(a_p, ((0, Mp - M), (0, Kp - K)))
    if Kp != K:
        b_p = jnp.pad(b_p, ((0, Kp - K), (0, 0)))

    out = pl.pallas_call(
        _matmul_kernel,
        out_shape=jax.ShapeDtypeStruct((Mp, N), jnp.float32),
        grid=(Mp // tm, Kp // tk),
        in_specs=[pl.BlockSpec((tm, tk), lambda i, k: (i, k)),
                  pl.BlockSpec((tk, N), lambda i, k: (k, 0))],
        out_specs=pl.BlockSpec((tm, N), lambda i, k: (i, 0)),
        scratch_shapes=[pltpu.VMEM((tm, N), jnp.float32)],
        compiler_params=pltpu.CompilerParams(
            dimension_semantics=("parallel", "arbitrary"),
            vmem_limit_bytes=_VMEM_LIMIT),
    )(a_p, b_p)
    return out[:M] if Mp != M else out


# ----------------------------------------------------------------------------
# Kernel 2: fused hypergraph convolutional network
#   mean( [x, HGx, HG^2 x, ...] ) with HG loaded into VMEM once.
# ----------------------------------------------------------------------------
def _hyper_kernel(hg_ref, x_ref, o_ref, *, num_layers):
    hg = hg_ref[...]
    x = x_ref[...]
    acc = x
    for _ in range(num_layers):           # static unroll (num_layers is small)
        x = jnp.dot(hg, x, preferred_element_type=jnp.float32)
        acc = acc + x
    o_ref[...] = acc * (1.0 / float(num_layers + 1))


def hypergraph_propagate(HG, x, num_layers, *, vmem_budget=24 * 1024 * 1024):
    if num_layers == 0:
        return x.astype(jnp.float32)
    P, D = x.shape
    fits = (P * P + 4 * P * D) * 4 <= vmem_budget
    if fits:
        return pl.pallas_call(
            functools.partial(_hyper_kernel, num_layers=num_layers),
            out_shape=jax.ShapeDtypeStruct((P, D), jnp.float32),
            grid=(1,),
            in_specs=[pl.BlockSpec((P, P), lambda i: (0, 0)),
                      pl.BlockSpec((P, D), lambda i: (0, 0))],
            out_specs=pl.BlockSpec((P, D), lambda i: (0, 0)),
            compiler_params=pltpu.CompilerParams(
                vmem_limit_bytes=_VMEM_LIMIT),
        )(HG.astype(jnp.float32), x.astype(jnp.float32))
    # Fallback: HG too large for VMEM -> layer-by-layer tiled propagation.
    g = x.astype(jnp.float32)
    acc = g
    for _ in range(num_layers):
        g = pallas_matmul(HG, g)
        acc = acc + g
    return acc / float(num_layers + 1)


# ----------------------------------------------------------------------------
# Kernel 3: fused SpatialTemporalEnhancedLayer, TB users per grid step
#   geo = relu(fc_geo(geo_adj @ seq)); total = seq + pos + geo
#   user_emb = mean_L( MHA(total, total, total) )
# ----------------------------------------------------------------------------
def _st_kernel(seq_ref, pos_ref, geo_ref, wg_ref, bg_ref,
               win_ref, bin_ref, wout_ref, bout_ref, o_ref, *, num_heads):
    TB, L, D = seq_ref.shape
    dh = D // num_heads
    scale = 1.0 / math.sqrt(dh)

    seq = seq_ref[...]          # (TB, L, D)
    pos = pos_ref[...]          # (TB, L, D)
    geo_adj = geo_ref[...]      # (TB, L, L)

    geo = jnp.einsum('blm,bmd->bld', geo_adj, seq,
                     preferred_element_type=jnp.float32)
    geo_flat = jnp.maximum(
        jnp.dot(geo.reshape(TB * L, D), wg_ref[...],
                preferred_element_type=jnp.float32) + bg_ref[...], 0.0)
    total = seq + pos + geo_flat.reshape(TB, L, D)

    # packed QKV projection (nn.MultiheadAttention in_proj); dropout omitted.
    qkv = (jnp.dot(total.reshape(TB * L, D), win_ref[...],
                   preferred_element_type=jnp.float32) + bin_ref[...])
    q = (qkv[:, 0 * D:1 * D] * scale).reshape(TB, L, D)
    k = qkv[:, 1 * D:2 * D].reshape(TB, L, D)
    v = qkv[:, 2 * D:3 * D].reshape(TB, L, D)

    heads = []
    for h in range(num_heads):
        sl = slice(h * dh, (h + 1) * dh)
        s = jnp.einsum('bld,bmd->blm', q[:, :, sl], k[:, :, sl],
                       preferred_element_type=jnp.float32)
        s = s - jnp.max(s, axis=-1, keepdims=True)
        p = jnp.exp(s)
        p = p / jnp.sum(p, axis=-1, keepdims=True)
        heads.append(jnp.einsum('blm,bmd->bld', p, v[:, :, sl],
                                preferred_element_type=jnp.float32))
    attn = jnp.concatenate(heads, axis=-1).reshape(TB * L, D)
    mha = (jnp.dot(attn, wout_ref[...], preferred_element_type=jnp.float32)
           + bout_ref[...]).reshape(TB, L, D)
    o_ref[...] = jnp.mean(mha, axis=1)          # (TB, D)


def st_user_embeddings(seq_embeds, pos_embs, geo_adjs, p, num_heads, *, tb=32):
    B, L, D = seq_embeds.shape
    if B <= tb:
        TB, Bp = B, B
    else:
        TB = tb                                   # multiple of 8
        Bp = _round_up(B, TB)
    if Bp != B:
        padb = ((0, Bp - B), (0, 0), (0, 0))
        seq_embeds = jnp.pad(seq_embeds, padb)
        pos_embs = jnp.pad(pos_embs, padb)
        geo_adjs = jnp.pad(geo_adjs, padb)

    out = pl.pallas_call(
        functools.partial(_st_kernel, num_heads=num_heads),
        out_shape=jax.ShapeDtypeStruct((Bp, D), jnp.float32),
        grid=(Bp // TB,),
        in_specs=[
            pl.BlockSpec((TB, L, D), lambda b: (b, 0, 0)),
            pl.BlockSpec((TB, L, D), lambda b: (b, 0, 0)),
            pl.BlockSpec((TB, L, L), lambda b: (b, 0, 0)),
            pl.BlockSpec((D, D), lambda b: (0, 0)),
            pl.BlockSpec((1, D), lambda b: (0, 0)),
            pl.BlockSpec((D, 3 * D), lambda b: (0, 0)),
            pl.BlockSpec((1, 3 * D), lambda b: (0, 0)),
            pl.BlockSpec((D, D), lambda b: (0, 0)),
            pl.BlockSpec((1, D), lambda b: (0, 0)),
        ],
        out_specs=pl.BlockSpec((TB, D), lambda b: (b, 0)),
        compiler_params=pltpu.CompilerParams(
            dimension_semantics=("parallel",),
            vmem_limit_bytes=_VMEM_LIMIT),
    )(seq_embeds.astype(jnp.float32), pos_embs.astype(jnp.float32),
      geo_adjs.astype(jnp.float32),
      p["fc_geo_w"].T, p["fc_geo_b"][None, :],
      p["mha_in_w"].T, p["mha_in_b"][None, :],
      p["mha_out_w"].T, p["mha_out_b"][None, :])
    return out[:B]


# ----------------------------------------------------------------------------
# Kernel 4: fused user_temporal_pref_augmentation, TB users per grid step
#   w_1 is split into pos/seq halves to avoid the (L, 2D) lane concat.
# ----------------------------------------------------------------------------
def _temporal_kernel(seqh_ref, pos_ref, lens_ref, w1p_ref, w1s_ref, b1_ref,
                     g1w_ref, g1b_ref, g2w_ref, w2t_ref, o_ref):
    TB, L, D = seqh_ref.shape
    seq_h = seqh_ref[...]                         # (TB, L, D)
    pos = pos_ref[...]                            # (TB, L, D)
    lens = lens_ref[...]                          # (TB, 1)

    hs = jnp.sum(seq_h, axis=1) / lens            # (TB, D)
    hs_g = jnp.dot(hs, g2w_ref[...], preferred_element_type=jnp.float32)

    nh_flat = jnp.tanh(
        jnp.dot(pos.reshape(TB * L, D), w1p_ref[...],
                preferred_element_type=jnp.float32)
        + jnp.dot(seq_h.reshape(TB * L, D), w1s_ref[...],
                  preferred_element_type=jnp.float32)
        + b1_ref[...])
    gate_flat = (jnp.dot(nh_flat, g1w_ref[...],
                         preferred_element_type=jnp.float32) + g1b_ref[...])
    gate = gate_flat.reshape(TB, L, D) + hs_g[:, None, :]
    nh = jax.nn.sigmoid(gate)
    beta = jnp.sum(nh * w2t_ref[...], axis=-1, keepdims=True)   # (TB, L, 1)
    o_ref[...] = jnp.sum(beta * seq_h, axis=1)                  # (TB, D)


def temporal_pref_augmentation(fusion_embs, lens, rev_seqs, masks, p, *, tb=32):
    B, L = rev_seqs.shape
    D = fusion_embs.shape[1]
    seq_h = fusion_embs[rev_seqs]                               # (B, L, D)
    pos_ids = jnp.arange(1, L + 1, dtype=jnp.int32)[None, :] * masks
    pos_emb = p["pos_emb"][pos_ids]                             # (B, L, D)
    lens_f = lens.astype(jnp.float32)[:, None]                  # (B, 1)

    if B <= tb:
        TB, Bp = B, B
    else:
        TB = tb
        Bp = _round_up(B, TB)
    if Bp != B:
        padb = ((0, Bp - B), (0, 0), (0, 0))
        seq_h = jnp.pad(seq_h, padb)
        pos_emb = jnp.pad(pos_emb, padb)
        lens_f = jnp.pad(lens_f, ((0, Bp - B), (0, 0)), constant_values=1.0)

    w1 = p["w1_w"]                                              # (D, 2D)
    out = pl.pallas_call(
        _temporal_kernel,
        out_shape=jax.ShapeDtypeStruct((Bp, D), jnp.float32),
        grid=(Bp // TB,),
        in_specs=[
            pl.BlockSpec((TB, L, D), lambda b: (b, 0, 0)),
            pl.BlockSpec((TB, L, D), lambda b: (b, 0, 0)),
            pl.BlockSpec((TB, 1), lambda b: (b, 0)),
            pl.BlockSpec((D, D), lambda b: (0, 0)),
            pl.BlockSpec((D, D), lambda b: (0, 0)),
            pl.BlockSpec((1, D), lambda b: (0, 0)),
            pl.BlockSpec((D, D), lambda b: (0, 0)),
            pl.BlockSpec((1, D), lambda b: (0, 0)),
            pl.BlockSpec((D, D), lambda b: (0, 0)),
            pl.BlockSpec((1, D), lambda b: (0, 0)),
        ],
        out_specs=pl.BlockSpec((TB, D), lambda b: (b, 0)),
        compiler_params=pltpu.CompilerParams(
            dimension_semantics=("parallel",),
            vmem_limit_bytes=_VMEM_LIMIT),
    )(seq_h, pos_emb, lens_f,
      w1[:, :D].T, w1[:, D:].T, p["w1_b"][None, :],
      p["glu1_w"].T, p["glu1_b"][None, :],
      p["glu2_w"].T, p["w2"].T)
    return out[:B]


# ----------------------------------------------------------------------------
# Full MSTHN forward (glue in plain JAX, hot compute in the kernels above)
# ----------------------------------------------------------------------------
def msthn_forward(p, G, HG, seqs, masks, geo_adjs, user_idx, lens, rev_seqs, *,
                  num_users, num_pois, emb_dim, num_heads,
                  num_local_layers, num_global_layers):
    nodes_embeds0 = p["nodes_emb"]                    # (N, D), N = U + P + 1
    B, L = seqs.shape
    pos_ids = jnp.arange(1, L + 1, dtype=jnp.int32)[None, :] * masks
    geo_adjs_f = geo_adjs.astype(jnp.float32)

    def spatial_temporal_layer(nodes_embeds):
        seq_embeds = nodes_embeds[seqs]               # (B, L, D) gather
        pos_embs = p["st_pos_emb"][pos_ids]           # (B, L, D)
        user_embs = st_user_embeddings(seq_embeds, pos_embs, geo_adjs_f,
                                       p, num_heads)
        nodes_embeds = nodes_embeds.at[user_idx].set(user_embs)
        lconv = pallas_matmul(G, nodes_embeds[:-1])   # sparse.mm(G, nodes[:-1])
        nodes_embeds = nodes_embeds.at[:-1].set(lconv)
        return nodes_embeds

    # ---- local spatial-temporal graph (shared layer applied num_local_layers x)
    embs = [nodes_embeds0]
    x = nodes_embeds0
    for _ in range(num_local_layers):
        x = spatial_temporal_layer(x)
        embs.append(x)
    local_nodes_embs = jnp.mean(jnp.stack(embs, axis=0), axis=0)

    local_batch_users_embs = local_nodes_embs[user_idx]
    local_pois_embs = local_nodes_embs[num_users:-1]

    # ---- global hypergraph convolutional network (fused, HG VMEM-resident)
    global_pois_embs = hypergraph_propagate(HG, nodes_embeds0[num_users:-1],
                                            num_global_layers)

    pois_embs = local_pois_embs + global_pois_embs
    fusion_nodes_embs = jnp.concatenate(
        [local_nodes_embs[:num_users], pois_embs,
         jnp.zeros((1, emb_dim), jnp.float32)], axis=0)

    batch_users_embs = temporal_pref_augmentation(fusion_nodes_embs, lens,
                                                  rev_seqs, masks, p)
    batch_users_embs = batch_users_embs + local_batch_users_embs
    return batch_users_embs, pois_embs


# ----------------------------------------------------------------------------
if __name__ == "__main__":
    NUM_USERS, NUM_POIS, SEQ_LEN = 4, 8, 8
    EMB_DIM, NUM_HEADS, BATCH = 32, 2, 2
    NUM_LOCAL_LAYERS, NUM_GLOBAL_LAYERS = 2, 2
    NUM_NODES = NUM_USERS + NUM_POIS + 1
    PADDING_IDX = NUM_USERS + NUM_POIS

    key = jax.random.PRNGKey(0)
    stdv = 1.0 / math.sqrt(EMB_DIM)

    def uni(k, shape):
        return jax.random.uniform(k, shape, jnp.float32, -stdv, stdv)

    keys = jax.random.split(key, 20)
    params = {
        # MSTHN
        "nodes_emb": uni(keys[0], (NUM_NODES, EMB_DIM)),
        "pos_emb": uni(keys[1], (SEQ_LEN + 1, EMB_DIM)),
        "w1_w": uni(keys[2], (EMB_DIM, 2 * EMB_DIM)),
        "w1_b": uni(keys[3], (EMB_DIM,)),
        "w2": uni(keys[4], (EMB_DIM, 1)),
        "glu1_w": uni(keys[5], (EMB_DIM, EMB_DIM)),
        "glu1_b": uni(keys[6], (EMB_DIM,)),
        "glu2_w": uni(keys[7], (EMB_DIM, EMB_DIM)),
        # SpatialTemporalEnhancedLayer
        "st_pos_emb": uni(keys[8], (SEQ_LEN + 1, EMB_DIM)),
        "fc_geo_w": uni(keys[9], (EMB_DIM, EMB_DIM)),
        "fc_geo_b": uni(keys[10], (EMB_DIM,)),
        "mha_in_w": uni(keys[11], (3 * EMB_DIM, EMB_DIM)),
        "mha_in_b": uni(keys[12], (3 * EMB_DIM,)),
        "mha_out_w": uni(keys[13], (EMB_DIM, EMB_DIM)),
        "mha_out_b": uni(keys[14], (EMB_DIM,)),
    }

    ikeys = jax.random.split(keys[15], 8)
    G = jax.random.uniform(ikeys[0], (NUM_NODES - 1, NUM_NODES - 1),
                           jnp.float32) / (NUM_NODES - 1)
    HG = jax.random.uniform(ikeys[1], (NUM_POIS, NUM_POIS), jnp.float32) / NUM_POIS
    lens = jnp.array([SEQ_LEN, 5], dtype=jnp.int32)
    masks = (jnp.arange(SEQ_LEN)[None, :] < lens[:, None]).astype(jnp.int32)
    seqs = jax.random.randint(ikeys[2], (BATCH, SEQ_LEN), NUM_USERS,
                              NUM_USERS + NUM_POIS, dtype=jnp.int32)
    seqs = jnp.where(masks == 1, seqs, PADDING_IDX)
    rev_seqs = jnp.flip(seqs, axis=1)
    geo_adjs = jax.random.uniform(ikeys[3], (BATCH, SEQ_LEN, SEQ_LEN),
                                  jnp.float32) / SEQ_LEN
    user_idx = jnp.array([0, 1], dtype=jnp.int32)

    fwd = jax.jit(functools.partial(
        msthn_forward,
        num_users=NUM_USERS, num_pois=NUM_POIS, emb_dim=EMB_DIM,
        num_heads=NUM_HEADS, num_local_layers=NUM_LOCAL_LAYERS,
        num_global_layers=NUM_GLOBAL_LAYERS))

    users_embs, pois_embs = fwd(params, G, HG, seqs, masks, geo_adjs,
                                user_idx, lens, rev_seqs)
    jax.block_until_ready((users_embs, pois_embs))
    assert users_embs.shape == (BATCH, EMB_DIM)
    assert pois_embs.shape == (NUM_POIS, EMB_DIM)
    assert bool(jnp.all(jnp.isfinite(users_embs)))
    assert bool(jnp.all(jnp.isfinite(pois_embs)))
    print("KERNEL_OK")
</pallas_src>

<mosaic_0001>
module attributes {stable_mosaic.version = 11 : i64} {
  func.func @_st_kernel(%arg0: i32, %arg1: memref<2x8x32xf32, #tpu.memory_space<vmem>>, %arg2: memref<2x8x32xf32, #tpu.memory_space<vmem>>, %arg3: memref<2x8x8xf32, #tpu.memory_space<vmem>>, %arg4: memref<32x32xf32, #tpu.memory_space<vmem>>, %arg5: memref<1x32xf32, #tpu.memory_space<vmem>>, %arg6: memref<32x96xf32, #tpu.memory_space<vmem>>, %arg7: memref<1x96xf32, #tpu.memory_space<vmem>>, %arg8: memref<32x32xf32, #tpu.memory_space<vmem>>, %arg9: memref<1x32xf32, #tpu.memory_space<vmem>>, %arg10: memref<2x32xf32, #tpu.memory_space<vmem>>) attributes {dimension_semantics = [#tpu.dimension_semantics<parallel>], iteration_bounds = array<i64: 1>, scalar_prefetch = 0 : i64, scratch_operands = 0 : i64, tpu.core_type = #tpu.core_type<tc>, window_params = [{transform_indices = @transform_0, window_bounds = array<i64: 2, 8, 32>}, {transform_indices = @transform_1, window_bounds = array<i64: 2, 8, 32>}, {transform_indices = @transform_2, window_bounds = array<i64: 2, 8, 8>}, {pipeline_mode = #tpu.pipeline_mode<synchronous>, transform_indices = @transform_3, window_bounds = array<i64: 32, 32>}, {pipeline_mode = #tpu.pipeline_mode<synchronous>, transform_indices = @transform_4, window_bounds = array<i64: 1, 32>}, {pipeline_mode = #tpu.pipeline_mode<synchronous>, transform_indices = @transform_5, window_bounds = array<i64: 32, 96>}, {pipeline_mode = #tpu.pipeline_mode<synchronous>, transform_indices = @transform_6, window_bounds = array<i64: 1, 96>}, {pipeline_mode = #tpu.pipeline_mode<synchronous>, transform_indices = @transform_7, window_bounds = array<i64: 32, 32>}, {pipeline_mode = #tpu.pipeline_mode<synchronous>, transform_indices = @transform_8, window_bounds = array<i64: 1, 32>}, {transform_indices = @transform_9, window_bounds = array<i64: 2, 32>}]} {
    %c0 = arith.constant 0 : index
    %c0_0 = arith.constant 0 : index
    %c0_1 = arith.constant 0 : index
    %0 = vector.load %arg1[%c0, %c0_0, %c0_1] : memref<2x8x32xf32, #tpu.memory_space<vmem>>, vector<2x8x32xf32>
    %c0_2 = arith.constant 0 : index
    %c0_3 = arith.constant 0 : index
    %c0_4 = arith.constant 0 : index
    %1 = vector.load %arg2[%c0_2, %c0_3, %c0_4] : memref<2x8x32xf32, #tpu.memory_space<vmem>>, vector<2x8x32xf32>
    %c0_5 = arith.constant 0 : index
    %c0_6 = arith.constant 0 : index
    %c0_7 = arith.constant 0 : index
    %2 = vector.load %arg3[%c0_5, %c0_6, %c0_7] : memref<2x8x8xf32, #tpu.memory_space<vmem>>, vector<2x8x8xf32>
    "tpu.trace_start"() <{level = 10 : i32, message = "blm,bmd->bld"}> : () -> ()
    %cst = arith.constant dense<0.000000e+00> : vector<2x8x32xf32>
    %3 = tpu.matmul %2, %0, %cst {dimension_numbers = #tpu.dot_dimension_numbers<[2], [1], [1], [2], [0, 0, 0, 1, 1, 2], [0], [0]>} : vector<2x8x8xf32>, vector<2x8x32xf32>, vector<2x8x32xf32> -> vector<2x8x32xf32>
    "tpu.trace_stop"() : () -> ()
    %4 = vector.shape_cast %3 : vector<2x8x32xf32> to vector<16x32xf32>
    %c0_8 = arith.constant 0 : index
    %c0_9 = arith.constant 0 : index
    %5 = vector.load %arg4[%c0_8, %c0_9] : memref<32x32xf32, #tpu.memory_space<vmem>>, vector<32x32xf32>
    %cst_10 = arith.constant dense<0.000000e+00> : vector<16x32xf32>
    %6 = tpu.matmul %4, %5, %cst_10 {dimension_numbers = #tpu.dot_dimension_numbers<[1], [0], [0], [1], [0, 0, 1, 1], [], []>} : vector<16x32xf32>, vector<32x32xf32>, vector<16x32xf32> -> vector<16x32xf32>
    %c0_11 = arith.constant 0 : index
    %c0_12 = arith.constant 0 : index
    %7 = vector.load %arg5[%c0_11, %c0_12] : memref<1x32xf32, #tpu.memory_space<vmem>>, vector<1x32xf32>
    %8 = vector.broadcast %7 : vector<1x32xf32> to vector<16x32xf32>
    %9 = arith.addf %6, %8 : vector<16x32xf32>
    %cst_13 = arith.constant 0.000000e+00 : f32
    %10 = vector.broadcast %cst_13 : f32 to vector<16x32xf32>
    %11 = arith.maximumf %9, %10 : vector<16x32xf32>
    %12 = arith.addf %0, %1 : vector<2x8x32xf32>
    %13 = vector.shape_cast %11 : vector<16x32xf32> to vector<2x8x32xf32>
    %14 = arith.addf %12, %13 : vector<2x8x32xf32>
    %15 = vector.shape_cast %14 : vector<2x8x32xf32> to vector<16x32xf32>
    %c0_14 = arith.constant 0 : index
    %c0_15 = arith.constant 0 : index
    %16 = vector.load %arg6[%c0_14, %c0_15] : memref<32x96xf32, #tpu.memory_space<vmem>>, vector<32x96xf32>
    %cst_16 = arith.constant dense<0.000000e+00> : vector<16x96xf32>
    %17 = tpu.matmul %15, %16, %cst_16 {dimension_numbers = #tpu.dot_dimension_numbers<[1], [0], [0], [1], [0, 0, 1, 1], [], []>} : vector<16x32xf32>, vector<32x96xf32>, vector<16x96xf32> -> vector<16x96xf32>
    %c0_17 = arith.constant 0 : index
    %c0_18 = arith.constant 0 : index
    %18 = vector.load %arg7[%c0_17, %c0_18] : memref<1x96xf32, #tpu.memory_space<vmem>>, vector<1x96xf32>
    %19 = vector.broadcast %18 : vector<1x96xf32> to vector<16x96xf32>
    %20 = arith.addf %17, %19 : vector<16x96xf32>
    %21 = vector.extract_strided_slice %20 {offsets = [0, 0], sizes = [16, 32], strides = [1, 1]} : vector<16x96xf32> to vector<16x32xf32>
    %cst_19 = arith.constant 2.500000e-01 : f32
    %22 = vector.broadcast %cst_19 : f32 to vector<16x32xf32>
    %23 = arith.mulf %21, %22 : vector<16x32xf32>
    %24 = vector.shape_cast %23 : vector<16x32xf32> to vector<2x8x32xf32>
    %25 = vector.extract_strided_slice %20 {offsets = [0, 32], sizes = [16, 32], strides = [1, 1]} : vector<16x96xf32> to vector<16x32xf32>
    %26 = vector.shape_cast %25 : vector<16x32xf32> to vector<2x8x32xf32>
    %27 = vector.extract_strided_slice %20 {offsets = [0, 64], sizes = [16, 32], strides = [1, 1]} : vector<16x96xf32> to vector<16x32xf32>
    %28 = vector.shape_cast %27 : vector<16x32xf32> to vector<2x8x32xf32>
    %29 = vector.extract_strided_slice %24 {offsets = [0, 0, 0], sizes = [2, 8, 16], strides = [1, 1, 1]} : vector<2x8x32xf32> to vector<2x8x16xf32>
    %30 = vector.extract_strided_slice %26 {offsets = [0, 0, 0], sizes = [2, 8, 16], strides = [1, 1, 1]} : vector<2x8x32xf32> to vector<2x8x16xf32>
    "tpu.trace_start"() <{level = 10 : i32, message = "bld,bmd->blm"}> : () -> ()
    %cst_20 = arith.constant dense<0.000000e+00> : vector<2x8x8xf32>
    %31 = tpu.matmul %29, %30, %cst_20 {dimension_numbers = #tpu.dot_dimension_numbers<[2], [2], [1], [1], [0, 0, 0, 1, 1, 1], [0], [0]>} : vector<2x8x16xf32>, vector<2x8x16xf32>, vector<2x8x8xf32> -> vector<2x8x8xf32>
    "tpu.trace_stop"() : () -> ()
    %cst_21 = arith.constant dense<0xFF800000> : vector<2x8xf32>
    %32 = vector.multi_reduction <maximumf>, %31, %cst_21 [2] : vector<2x8x8xf32> to vector<2x8xf32>
    %33 = vector.shape_cast %32 : vector<2x8xf32> to vector<2x8x1xf32>
    %34 = vector.broadcast %33 : vector<2x8x1xf32> to vector<2x8x8xf32>
    %35 = arith.subf %31, %34 : vector<2x8x8xf32>
    %36 = math.exp %35 : vector<2x8x8xf32>
    %cst_22 = arith.constant dense<0.000000e+00> : vector<2x8xf32>
    %37 = vector.multi_reduction <add>, %36, %cst_22 [2] : vector<2x8x8xf32> to vector<2x8xf32>
    %38 = vector.shape_cast %37 : vector<2x8xf32> to vector<2x8x1xf32>
    %39 = vector.broadcast %38 : vector<2x8x1xf32> to vector<2x8x8xf32>
    %40 = arith.divf %36, %39 : vector<2x8x8xf32>
    %41 = vector.extract_strided_slice %28 {offsets = [0, 0, 0], sizes = [2, 8, 16], strides = [1, 1, 1]} : vector<2x8x32xf32> to vector<2x8x16xf32>
    "tpu.trace_start"() <{level = 10 : i32, message = "blm,bmd->bld"}> : () -> ()
    %cst_23 = arith.constant dense<0.000000e+00> : vector<2x8x16xf32>
    %42 = tpu.matmul %40, %41, %cst_23 {dimension_numbers = #tpu.dot_dimension_numbers<[2], [1], [1], [2], [0, 0, 0, 1, 1, 2], [0], [0]>} : vector<2x8x8xf32>, vector<2x8x16xf32>, vector<2x8x16xf32> -> vector<2x8x16xf32>
    "tpu.trace_stop"() : () -> ()
    %43 = vector.extract_strided_slice %24 {offsets = [0, 0, 16], sizes = [2, 8, 16], strides = [1, 1, 1]} : vector<2x8x32xf32> to vector<2x8x16xf32>
    %44 = vector.extract_strided_slice %26 {offsets = [0, 0, 16], sizes = [2, 8, 16], strides = [1, 1, 1]} : vector<2x8x32xf32> to vector<2x8x16xf32>
    "tpu.trace_start"() <{level = 10 : i32, message = "bld,bmd->blm"}> : () -> ()
    %cst_24 = arith.constant dense<0.000000e+00> : vector<2x8x8xf32>
    %45 = tpu.matmul %43, %44, %cst_24 {dimension_numbers = #tpu.dot_dimension_numbers<[2], [2], [1], [1], [0, 0, 0, 1, 1, 1], [0], [0]>} : vector<2x8x16xf32>, vector<2x8x16xf32>, vector<2x8x8xf32> -> vector<2x8x8xf32>
    "tpu.trace_stop"() : () -> ()
    %cst_25 = arith.constant dense<0xFF800000> : vector<2x8xf32>
    %46 = vector.multi_reduction <maximumf>, %45, %cst_25 [2] : vector<2x8x8xf32> to vector<2x8xf32>
    %47 = vector.shape_cast %46 : vector<2x8xf32> to vector<2x8x1xf32>
    %48 = vector.broadcast %47 : vector<2x8x1xf32> to vector<2x8x8xf32>
    %49 = arith.subf %45, %48 : vector<2x8x8xf32>
    %50 = math.exp %49 : vector<2x8x8xf32>
    %cst_26 = arith.constant dense<0.000000e+00> : vector<2x8xf32>
    %51 = vector.multi_reduction <add>, %50, %cst_26 [2] : vector<2x8x8xf32> to vector<2x8xf32>
    %52 = vector.shape_cast %51 : vector<2x8xf32> to vector<2x8x1xf32>
    %53 = vector.broadcast %52 : vector<2x8x1xf32> to vector<2x8x8xf32>
    %54 = arith.divf %50, %53 : vector<2x8x8xf32>
    %55 = vector.extract_strided_slice %28 {offsets = [0, 0, 16], sizes = [2, 8, 16], strides = [1, 1, 1]} : vector<2x8x32xf32> to vector<2x8x16xf32>
    "tpu.trace_start"() <{level = 10 : i32, message = "blm,bmd->bld"}> : () -> ()
    %cst_27 = arith.constant dense<0.000000e+00> : vector<2x8x16xf32>
    %56 = tpu.matmul %54, %55, %cst_27 {dimension_numbers = #tpu.dot_dimension_numbers<[2], [1], [1], [2], [0, 0, 0, 1, 1, 2], [0], [0]>} : vector<2x8x8xf32>, vector<2x8x16xf32>, vector<2x8x16xf32> -> vector<2x8x16xf32>
    "tpu.trace_stop"() : () -> ()
    %57 = tpu.concatenate %42, %56 in 2 : vector<2x8x16xf32>, vector<2x8x16xf32> -> vector<2x8x32xf32>
    %58 = vector.shape_cast %57 : vector<2x8x32xf32> to vector<16x32xf32>
    %c0_28 = arith.constant 0 : index
    %c0_29 = arith.constant 0 : index
    %59 = vector.load %arg8[%c0_28, %c0_29] : memref<32x32xf32, #tpu.memory_space<vmem>>, vector<32x32xf32>
    %cst_30 = arith.constant dense<0.000000e+00> : vector<16x32xf32>
    %60 = tpu.matmul %58, %59, %cst_30 {dimension_numbers = #tpu.dot_dimension_numbers<[1], [0], [0], [1], [0, 0, 1, 1], [], []>} : vector<16x32xf32>, vector<32x32xf32>, vector<16x32xf32> -> vector<16x32xf32>
    %c0_31 = arith.constant 0 : index
    %c0_32 = arith.constant 0 : index
    %61 = vector.load %arg9[%c0_31, %c0_32] : memref<1x32xf32, #tpu.memory_space<vmem>>, vector<1x32xf32>
    %62 = vector.broadcast %61 : vector<1x32xf32> to vector<16x32xf32>
    %63 = arith.addf %60, %62 : vector<16x32xf32>
    %64 = vector.shape_cast %63 : vector<16x32xf32> to vector<2x8x32xf32>
    %cst_33 = arith.constant dense<0.000000e+00> : vector<2x32xf32>
    %65 = vector.multi_reduction <add>, %64, %cst_33 [1] : vector<2x8x32xf32> to vector<2x32xf32>
    %cst_34 = arith.constant 8.000000e+00 : f32
    %66 = vector.broadcast %cst_34 : f32 to vector<2x32xf32>
    %67 = arith.divf %65, %66 : vector<2x32xf32>
    %c0_35 = arith.constant 0 : index
    %c0_36 = arith.constant 0 : index
    %68 = vector.load %arg10[%c0_35, %c0_36] : memref<2x32xf32, #tpu.memory_space<vmem>>, vector<2x32xf32>
    tpu.vector_store %arg10[%c0_35, %c0_36], %67 {strides = array<i32>} : memref<2x32xf32, #tpu.memory_space<vmem>>, vector<2x32xf32>,
    return
  }
  func.func @transform_0(%arg0: i32) -> (i32, i32, i32) {
    %c0_i32 = arith.constant 0 : i32
    %c0_i32_0 = arith.constant 0 : i32
    %c0_i32_1 = arith.constant 0 : i32
    return %arg0, %c0_i32, %c0_i32_0 : i32, i32, i32
  }
  func.func @transform_1(%arg0: i32) -> (i32, i32, i32) {
    %c0_i32 = arith.constant 0 : i32
    %c0_i32_0 = arith.constant 0 : i32
    %c0_i32_1 = arith.constant 0 : i32
    return %arg0, %c0_i32, %c0_i32_0 : i32, i32, i32
  }
  func.func @transform_2(%arg0: i32) -> (i32, i32, i32) {
    %c0_i32 = arith.constant 0 : i32
    %c0_i32_0 = arith.constant 0 : i32
    %c0_i32_1 = arith.constant 0 : i32
    return %arg0, %c0_i32, %c0_i32_0 : i32, i32, i32
  }
  func.func @transform_3(%arg0: i32) -> (i32, i32) {
    %c0_i32 = arith.constant 0 : i32
    %c0_i32_0 = arith.constant 0 : i32
    %c0_i32_1 = arith.constant 0 : i32
    return %c0_i32, %c0_i32_0 : i32, i32
  }
  func.func @transform_4(%arg0: i32) -> (i32, i32) {
    %c0_i32 = arith.constant 0 : i32
    %c0_i32_0 = arith.constant 0 : i32
    %c0_i32_1 = arith.constant 0 : i32
    return %c0_i32, %c0_i32_0 : i32, i32
  }
  func.func @transform_5(%arg0: i32) -> (i32, i32) {
    %c0_i32 = arith.constant 0 : i32
    %c0_i32_0 = arith.constant 0 : i32
    %c0_i32_1 = arith.constant 0 : i32
    return %c0_i32, %c0_i32_0 : i32, i32
  }
  func.func @transform_6(%arg0: i32) -> (i32, i32) {
    %c0_i32 = arith.constant 0 : i32
    %c0_i32_0 = arith.constant 0 : i32
    %c0_i32_1 = arith.constant 0 : i32
    return %c0_i32, %c0_i32_0 : i32, i32
  }
  func.func @transform_7(%arg0: i32) -> (i32, i32) {
    %c0_i32 = arith.constant 0 : i32
    %c0_i32_0 = arith.constant 0 : i32
    %c0_i32_1 = arith.constant 0 : i32
    return %c0_i32, %c0_i32_0 : i32, i32
  }
  func.func @transform_8(%arg0: i32) -> (i32, i32) {
    %c0_i32 = arith.constant 0 : i32
    %c0_i32_0 = arith.constant 0 : i32
    %c0_i32_1 = arith.constant 0 : i32
    return %c0_i32, %c0_i32_0 : i32, i32
  }
  func.func @transform_9(%arg0: i32) -> (i32, i32) {
    %c0_i32 = arith.constant 0 : i32
    %c0_i32_0 = arith.constant 0 : i32
    return %arg0, %c0_i32 : i32, i32
  }
}

module attributes {stable_mosaic.version = 11 : i64} {
  func.func @_matmul_kernel(%arg0: i32, %arg1: i32, %arg2: memref<12x12xbf16, #tpu.memory_space<vmem>>, %arg3: memref<12x32xbf16, #tpu.memory_space<vmem>>, %arg4: memref<12x32xf32, #tpu.memory_space<vmem>>, %arg5: memref<12x32xf32, #tpu.memory_space<vmem>>) attributes {dimension_semantics = [#tpu.dimension_semantics<parallel>, #tpu.dimension_semantics<arbitrary>], iteration_bounds = array<i64: 1, 1>, scalar_prefetch = 0 : i64, scratch_operands = 1 : i64, tpu.core_type = #tpu.core_type<tc>, window_params = [{transform_indices = @transform_0, window_bounds = array<i64: 12, 12>}, {transform_indices = @transform_1, window_bounds = array<i64: 12, 32>}, {transform_indices = @transform_2, window_bounds = array<i64: 12, 32>}]} {
    %c0_i32 = arith.constant 0 : i32
    %0 = arith.cmpi eq, %arg1, %c0_i32 : i32
    %1 = arith.extui %0 : i1 to i32
    %c0_i32_0 = arith.constant 0 : i32
    %2 = arith.cmpi ne, %1, %c0_i32_0 : i32
    scf.if %2 {
      %cst_10 = arith.constant 0.000000e+00 : f32
      %12 = vector.broadcast %cst_10 : f32 to vector<12x32xf32>
      %c0_11 = arith.constant 0 : index
      %c0_12 = arith.constant 0 : index
      %13 = vector.load %arg5[%c0_11, %c0_12] : memref<12x32xf32, #tpu.memory_space<vmem>>, vector<12x32xf32>
      tpu.vector_store %arg5[%c0_11, %c0_12], %12 {strides = array<i32>} : memref<12x32xf32, #tpu.memory_space<vmem>>, vector<12x32xf32>,
    } else {
    }
    %c0 = arith.constant 0 : index
    %c0_1 = arith.constant 0 : index
    %3 = vector.load %arg5[%c0, %c0_1] : memref<12x32xf32, #tpu.memory_space<vmem>>, vector<12x32xf32>
    %c0_2 = arith.constant 0 : index
    %c0_3 = arith.constant 0 : index
    %4 = vector.load %arg2[%c0_2, %c0_3] : memref<12x12xbf16, #tpu.memory_space<vmem>>, vector<12x12xbf16>
    %c0_4 = arith.constant 0 : index
    %c0_5 = arith.constant 0 : index
    %5 = vector.load %arg3[%c0_4, %c0_5] : memref<12x32xbf16, #tpu.memory_space<vmem>>, vector<12x32xbf16>
    %cst = arith.constant dense<0.000000e+00> : vector<12x32xf32>
    %6 = tpu.matmul %4, %5, %cst {dimension_numbers = #tpu.dot_dimension_numbers<[1], [0], [0], [1], [0, 0, 1, 1], [], []>} : vector<12x12xbf16>, vector<12x32xbf16>, vector<12x32xf32> -> vector<12x32xf32>
    %7 = arith.addf %3, %6 : vector<12x32xf32>
    %c0_6 = arith.constant 0 : index
    %c0_7 = arith.constant 0 : index
    %8 = vector.load %arg5[%c0_6, %c0_7] : memref<12x32xf32, #tpu.memory_space<vmem>>, vector<12x32xf32>
    tpu.vector_store %arg5[%c0_6, %c0_7], %7 {strides = array<i32>} : memref<12x32xf32, #tpu.memory_space<vmem>>, vector<12x32xf32>,
    %c0_i32_8 = arith.constant 0 : i32
    %9 = arith.cmpi eq, %arg1, %c0_i32_8 : i32
    %10 = arith.extui %9 : i1 to i32
    %c0_i32_9 = arith.constant 0 : i32
    %11 = arith.cmpi ne, %10, %c0_i32_9 : i32
    scf.if %11 {
      %c0_10 = arith.constant 0 : index
      %c0_11 = arith.constant 0 : index
      %12 = vector.load %arg5[%c0_10, %c0_11] : memref<12x32xf32, #tpu.memory_space<vmem>>, vector<12x32xf32>
      %c0_12 = arith.constant 0 : index
      %c0_13 = arith.constant 0 : index
      %13 = vector.load %arg4[%c0_12, %c0_13] : memref<12x32xf32, #tpu.memory_space<vmem>>, vector<12x32xf32>
      tpu.vector_store %arg4[%c0_12, %c0_13], %12 {strides = array<i32>} : memref<12x32xf32, #tpu.memory_space<vmem>>, vector<12x32xf32>,
    } else {
    }
    return
  }
  func.func @transform_0(%arg0: i32, %arg1: i32) -> (i32, i32) {
    %c0_i32 = arith.constant 0 : i32
    return %arg0, %arg1 : i32, i32
  }
  func.func @transform_1(%arg0: i32, %arg1: i32) -> (i32, i32) {
    %c0_i32 = arith.constant 0 : i32
    %c0_i32_0 = arith.constant 0 : i32
    return %arg1, %c0_i32 : i32, i32
  }
  func.func @transform_2(%arg0: i32, %arg1: i32) -> (i32, i32) {
    %c0_i32 = arith.constant 0 : i32
    %c0_i32_0 = arith.constant 0 : i32
    return %arg0, %c0_i32 : i32, i32
  }
}

module attributes {stable_mosaic.version = 11 : i64} {
  func.func @_hyper_kernel(%arg0: i32, %arg1: memref<8x8xf32, #tpu.memory_space<vmem>>, %arg2: memref<8x32xf32, #tpu.memory_space<vmem>>, %arg3: memref<8x32xf32, #tpu.memory_space<vmem>>) attributes {dimension_semantics = [#tpu.dimension_semantics<arbitrary>], iteration_bounds = array<i64: 1>, scalar_prefetch = 0 : i64, scratch_operands = 0 : i64, tpu.core_type = #tpu.core_type<tc>, window_params = [{pipeline_mode = #tpu.pipeline_mode<synchronous>, transform_indices = @transform_0, window_bounds = array<i64: 8, 8>}, {pipeline_mode = #tpu.pipeline_mode<synchronous>, transform_indices = @transform_1, window_bounds = array<i64: 8, 32>}, {pipeline_mode = #tpu.pipeline_mode<synchronous>, transform_indices = @transform_2, window_bounds = array<i64: 8, 32>}]} {
    %c0 = arith.constant 0 : index
    %c0_0 = arith.constant 0 : index
    %0 = vector.load %arg1[%c0, %c0_0] : memref<8x8xf32, #tpu.memory_space<vmem>>, vector<8x8xf32>
    %c0_1 = arith.constant 0 : index
    %c0_2 = arith.constant 0 : index
    %1 = vector.load %arg2[%c0_1, %c0_2] : memref<8x32xf32, #tpu.memory_space<vmem>>, vector<8x32xf32>
    %cst = arith.constant dense<0.000000e+00> : vector<8x32xf32>
    %2 = tpu.matmul %0, %1, %cst {dimension_numbers = #tpu.dot_dimension_numbers<[1], [0], [0], [1], [0, 0, 1, 1], [], []>} : vector<8x8xf32>, vector<8x32xf32>, vector<8x32xf32> -> vector<8x32xf32>
    %3 = arith.addf %1, %2 : vector<8x32xf32>
    %cst_3 = arith.constant dense<0.000000e+00> : vector<8x32xf32>
    %4 = tpu.matmul %0, %2, %cst_3 {dimension_numbers = #tpu.dot_dimension_numbers<[1], [0], [0], [1], [0, 0, 1, 1], [], []>} : vector<8x8xf32>, vector<8x32xf32>, vector<8x32xf32> -> vector<8x32xf32>
    %5 = arith.addf %3, %4 : vector<8x32xf32>
    %cst_4 = arith.constant 0.333333343 : f32
    %6 = vector.broadcast %cst_4 : f32 to vector<8x32xf32>
    %7 = arith.mulf %5, %6 : vector<8x32xf32>
    %c0_5 = arith.constant 0 : index
    %c0_6 = arith.constant 0 : index
    %8 = vector.load %arg3[%c0_5, %c0_6] : memref<8x32xf32, #tpu.memory_space<vmem>>, vector<8x32xf32>
    tpu.vector_store %arg3[%c0_5, %c0_6], %7 {strides = array<i32>} : memref<8x32xf32, #tpu.memory_space<vmem>>, vector<8x32xf32>,
    return
  }
  func.func @transform_0(%arg0: i32) -> (i32, i32) {
    %c0_i32 = arith.constant 0 : i32
    %c0_i32_0 = arith.constant 0 : i32
    %c0_i32_1 = arith.constant 0 : i32
    return %c0_i32, %c0_i32_0 : i32, i32
  }
  func.func @transform_1(%arg0: i32) -> (i32, i32) {
    %c0_i32 = arith.constant 0 : i32
    %c0_i32_0 = arith.constant 0 : i32
    %c0_i32_1 = arith.constant 0 : i32
    return %c0_i32, %c0_i32_0 : i32, i32
  }
  func.func @transform_2(%arg0: i32) -> (i32, i32) {
    %c0_i32 = arith.constant 0 : i32
    %c0_i32_0 = arith.constant 0 : i32
    %c0_i32_1 = arith.constant 0 : i32
    return %c0_i32, %c0_i32_0 : i32, i32
  }
}

module attributes {stable_mosaic.version = 11 : i64} {
  func.func @_temporal_kernel(%arg0: i32, %arg1: memref<2x8x32xf32, #tpu.memory_space<vmem>>, %arg2: memref<2x8x32xf32, #tpu.memory_space<vmem>>, %arg3: memref<2x1xf32, #tpu.memory_space<vmem>>, %arg4: memref<32x32xf32, #tpu.memory_space<vmem>>, %arg5: memref<32x32xf32, #tpu.memory_space<vmem>>, %arg6: memref<1x32xf32, #tpu.memory_space<vmem>>, %arg7: memref<32x32xf32, #tpu.memory_space<vmem>>, %arg8: memref<1x32xf32, #tpu.memory_space<vmem>>, %arg9: memref<32x32xf32, #tpu.memory_space<vmem>>, %arg10: memref<1x32xf32, #tpu.memory_space<vmem>>, %arg11: memref<2x32xf32, #tpu.memory_space<vmem>>) attributes {dimension_semantics = [#tpu.dimension_semantics<parallel>], iteration_bounds = array<i64: 1>, scalar_prefetch = 0 : i64, scratch_operands = 0 : i64, tpu.core_type = #tpu.core_type<tc>, window_params = [{transform_indices = @transform_0, window_bounds = array<i64: 2, 8, 32>}, {transform_indices = @transform_1, window_bounds = array<i64: 2, 8, 32>}, {transform_indices = @transform_2, window_bounds = array<i64: 2, 1>}, {pipeline_mode = #tpu.pipeline_mode<synchronous>, transform_indices = @transform_3, window_bounds = array<i64: 32, 32>}, {pipeline_mode = #tpu.pipeline_mode<synchronous>, transform_indices = @transform_4, window_bounds = array<i64: 32, 32>}, {pipeline_mode = #tpu.pipeline_mode<synchronous>, transform_indices = @transform_5, window_bounds = array<i64: 1, 32>}, {pipeline_mode = #tpu.pipeline_mode<synchronous>, transform_indices = @transform_6, window_bounds = array<i64: 32, 32>}, {pipeline_mode = #tpu.pipeline_mode<synchronous>, transform_indices = @transform_7, window_bounds = array<i64: 1, 32>}, {pipeline_mode = #tpu.pipeline_mode<synchronous>, transform_indices = @transform_8, window_bounds = array<i64: 32, 32>}, {pipeline_mode = #tpu.pipeline_mode<synchronous>, transform_indices = @transform_9, window_bounds = array<i64: 1, 32>}, {transform_indices = @transform_10, window_bounds = array<i64: 2, 32>}]} {
    %c0 = arith.constant 0 : index
    %c0_0 = arith.constant 0 : index
    %c0_1 = arith.constant 0 : index
    %0 = vector.load %arg1[%c0, %c0_0, %c0_1] : memref<2x8x32xf32, #tpu.memory_space<vmem>>, vector<2x8x32xf32>
    %c0_2 = arith.constant 0 : index
    %c0_3 = arith.constant 0 : index
    %c0_4 = arith.constant 0 : index
    %1 = vector.load %arg2[%c0_2, %c0_3, %c0_4] : memref<2x8x32xf32, #tpu.memory_space<vmem>>, vector<2x8x32xf32>
    %c0_5 = arith.constant 0 : index
    %c0_6 = arith.constant 0 : index
    %2 = vector.load %arg3[%c0_5, %c0_6] : memref<2x1xf32, #tpu.memory_space<vmem>>, vector<2x1xf32>
    %cst = arith.constant dense<0.000000e+00> : vector<2x32xf32>
    %3 = vector.multi_reduction <add>, %0, %cst [1] : vector<2x8x32xf32> to vector<2x32xf32>
    %4 = vector.broadcast %2 : vector<2x1xf32> to vector<2x32xf32>
    %5 = arith.divf %3, %4 : vector<2x32xf32>
    %c0_7 = arith.constant 0 : index
    %c0_8 = arith.constant 0 : index
    %6 = vector.load %arg9[%c0_7, %c0_8] : memref<32x32xf32, #tpu.memory_space<vmem>>, vector<32x32xf32>
    %cst_9 = arith.constant dense<0.000000e+00> : vector<2x32xf32>
    %7 = tpu.matmul %5, %6, %cst_9 {dimension_numbers = #tpu.dot_dimension_numbers<[1], [0], [0], [1], [0, 0, 1, 1], [], []>} : vector<2x32xf32>, vector<32x32xf32>, vector<2x32xf32> -> vector<2x32xf32>
    %8 = vector.shape_cast %1 : vector<2x8x32xf32> to vector<16x32xf32>
    %c0_10 = arith.constant 0 : index
    %c0_11 = arith.constant 0 : index
    %9 = vector.load %arg4[%c0_10, %c0_11] : memref<32x32xf32, #tpu.memory_space<vmem>>, vector<32x32xf32>
    %cst_12 = arith.constant dense<0.000000e+00> : vector<16x32xf32>
    %10 = tpu.matmul %8, %9, %cst_12 {dimension_numbers = #tpu.dot_dimension_numbers<[1], [0], [0], [1], [0, 0, 1, 1], [], []>} : vector<16x32xf32>, vector<32x32xf32>, vector<16x32xf32> -> vector<16x32xf32>
    %11 = vector.shape_cast %0 : vector<2x8x32xf32> to vector<16x32xf32>
    %c0_13 = arith.constant 0 : index
    %c0_14 = arith.constant 0 : index
    %12 = vector.load %arg5[%c0_13, %c0_14] : memref<32x32xf32, #tpu.memory_space<vmem>>, vector<32x32xf32>
    %cst_15 = arith.constant dense<0.000000e+00> : vector<16x32xf32>
    %13 = tpu.matmul %11, %12, %cst_15 {dimension_numbers = #tpu.dot_dimension_numbers<[1], [0], [0], [1], [0, 0, 1, 1], [], []>} : vector<16x32xf32>, vector<32x32xf32>, vector<16x32xf32> -> vector<16x32xf32>
    %14 = arith.addf %10, %13 : vector<16x32xf32>
    %c0_16 = arith.constant 0 : index
    %c0_17 = arith.constant 0 : index
    %15 = vector.load %arg6[%c0_16, %c0_17] : memref<1x32xf32, #tpu.memory_space<vmem>>, vector<1x32xf32>
    %16 = vector.broadcast %15 : vector<1x32xf32> to vector<16x32xf32>
    %17 = arith.addf %14, %16 : vector<16x32xf32>
    %18 = math.tanh %17 : vector<16x32xf32>
    %c0_18 = arith.constant 0 : index
    %c0_19 = arith.constant 0 : index
    %19 = vector.load %arg7[%c0_18, %c0_19] : memref<32x32xf32, #tpu.memory_space<vmem>>, vector<32x32xf32>
    %cst_20 = arith.constant dense<0.000000e+00> : vector<16x32xf32>
    %20 = tpu.matmul %18, %19, %cst_20 {dimension_numbers = #tpu.dot_dimension_numbers<[1], [0], [0], [1], [0, 0, 1, 1], [], []>} : vector<16x32xf32>, vector<32x32xf32>, vector<16x32xf32> -> vector<16x32xf32>
    %c0_21 = arith.constant 0 : index
    %c0_22 = arith.constant 0 : index
    %21 = vector.load %arg8[%c0_21, %c0_22] : memref<1x32xf32, #tpu.memory_space<vmem>>, vector<1x32xf32>
    %22 = vector.broadcast %21 : vector<1x32xf32> to vector<16x32xf32>
    %23 = arith.addf %20, %22 : vector<16x32xf32>
    %24 = vector.shape_cast %23 : vector<16x32xf32> to vector<2x8x32xf32>
    %25 = vector.shape_cast %7 : vector<2x32xf32> to vector<2x1x32xf32>
    %26 = vector.broadcast %25 : vector<2x1x32xf32> to vector<2x8x32xf32>
    %27 = arith.addf %24, %26 : vector<2x8x32xf32>
    %28 = arith.negf %27 : vector<2x8x32xf32>
    %29 = math.exp %28 : vector<2x8x32xf32>
    %cst_23 = arith.constant 1.000000e+00 : f32
    %30 = vector.broadcast %cst_23 : f32 to vector<2x8x32xf32>
    %31 = arith.addf %30, %29 : vector<2x8x32xf32>
    %32 = arith.divf %30, %31 : vector<2x8x32xf32>
    %c0_24 = arith.constant 0 : index
    %c0_25 = arith.constant 0 : index
    %33 = vector.load %arg10[%c0_24, %c0_25] : memref<1x32xf32, #tpu.memory_space<vmem>>, vector<1x32xf32>
    %34 = vector.shape_cast %33 : vector<1x32xf32> to vector<1x1x32xf32>
    %35 = vector.broadcast %34 : vector<1x1x32xf32> to vector<2x8x32xf32>
    %36 = arith.mulf %32, %35 : vector<2x8x32xf32>
    %cst_26 = arith.constant dense<0.000000e+00> : vector<2x8xf32>
    %37 = vector.multi_reduction <add>, %36, %cst_26 [2] : vector<2x8x32xf32> to vector<2x8xf32>
    %38 = vector.shape_cast %37 : vector<2x8xf32> to vector<2x8x1xf32>
    %39 = vector.broadcast %38 : vector<2x8x1xf32> to vector<2x8x32xf32>
    %40 = arith.mulf %39, %0 : vector<2x8x32xf32>
    %cst_27 = arith.constant dense<0.000000e+00> : vector<2x32xf32>
    %41 = vector.multi_reduction <add>, %40, %cst_27 [1] : vector<2x8x32xf32> to vector<2x32xf32>
    %c0_28 = arith.constant 0 : index
    %c0_29 = arith.constant 0 : index
    %42 = vector.load %arg11[%c0_28, %c0_29] : memref<2x32xf32, #tpu.memory_space<vmem>>, vector<2x32xf32>
    tpu.vector_store %arg11[%c0_28, %c0_29], %41 {strides = array<i32>} : memref<2x32xf32, #tpu.memory_space<vmem>>, vector<2x32xf32>,
    return
  }
  func.func @transform_0(%arg0: i32) -> (i32, i32, i32) {
    %c0_i32 = arith.constant 0 : i32
    %c0_i32_0 = arith.constant 0 : i32
    %c0_i32_1 = arith.constant 0 : i32
    return %arg0, %c0_i32, %c0_i32_0 : i32, i32, i32
  }
  func.func @transform_1(%arg0: i32) -> (i32, i32, i32) {
    %c0_i32 = arith.constant 0 : i32
    %c0_i32_0 = arith.constant 0 : i32
    %c0_i32_1 = arith.constant 0 : i32
    return %arg0, %c0_i32, %c0_i32_0 : i32, i32, i32
  }
  func.func @transform_2(%arg0: i32) -> (i32, i32) {
    %c0_i32 = arith.constant 0 : i32
    %c0_i32_0 = arith.constant 0 : i32
    return %arg0, %c0_i32 : i32, i32
  }
  func.func @transform_3(%arg0: i32) -> (i32, i32) {
    %c0_i32 = arith.constant 0 : i32
    %c0_i32_0 = arith.constant 0 : i32
    %c0_i32_1 = arith.constant 0 : i32
    return %c0_i32, %c0_i32_0 : i32, i32
  }
  func.func @transform_4(%arg0: i32) -> (i32, i32) {
    %c0_i32 = arith.constant 0 : i32
    %c0_i32_0 = arith.constant 0 : i32
    %c0_i32_1 = arith.constant 0 : i32
    return %c0_i32, %c0_i32_0 : i32, i32
  }
  func.func @transform_5(%arg0: i32) -> (i32, i32) {
    %c0_i32 = arith.constant 0 : i32
    %c0_i32_0 = arith.constant 0 : i32
    %c0_i32_1 = arith.constant 0 : i32
    return %c0_i32, %c0_i32_0 : i32, i32
  }
  func.func @transform_6(%arg0: i32) -> (i32, i32) {
    %c0_i32 = arith.constant 0 : i32
    %c0_i32_0 = arith.constant 0 : i32
    %c0_i32_1 = arith.constant 0 : i32
    return %c0_i32, %c0_i32_0 : i32, i32
  }
  func.func @transform_7(%arg0: i32) -> (i32, i32) {
    %c0_i32 = arith.constant 0 : i32
    %c0_i32_0 = arith.constant 0 : i32
    %c0_i32_1 = arith.constant 0 : i32
    return %c0_i32, %c0_i32_0 : i32, i32
  }
  func.func @transform_8(%arg0: i32) -> (i32, i32) {
    %c0_i32 = arith.constant 0 : i32
    %c0_i32_0 = arith.constant 0 : i32
    %c0_i32_1 = arith.constant 0 : i32
    return %c0_i32, %c0_i32_0 : i32, i32
  }
  func.func @transform_9(%arg0: i32) -> (i32, i32) {
    %c0_i32 = arith.constant 0 : i32
    %c0_i32_0 = arith.constant 0 : i32
    %c0_i32_1 = arith.constant 0 : i32
    return %c0_i32, %c0_i32_0 : i32, i32
  }
  func.func @transform_10(%arg0: i32) -> (i32, i32) {
    %c0_i32 = arith.constant 0 : i32
    %c0_i32_0 = arith.constant 0 : i32
    return %arg0, %c0_i32 : i32, i32
  }
}

</mosaic_0001>

<llo_original>
// kernel: msthn_forward.7
$region0: #{msthn_forward.7}
  #allocation0 [shape = 'u32[]', space=smem, size = 0x4, offset = 0x4, fixed_abs, tag = 'smem constant byte address 0x4 - core index']
  #allocation1 [shape = 'u32[144,128]{1,0:T(1,128)}', space=vmem, size = 0x12000, scoped, tag = 'internal scratch']
  #allocation2 [shape = 'f32[12,32]{1,0:T(8,128)}', space=vmem, size = 0x2000, scoped, tag = 'scratch operand']
  %s0 = inlined_call_operand.vmem [shape: bf16[12,12], index: 0, kind: input, shape index: {}]
  %s1 = inlined_call_operand.vmem [shape: bf16[12,32], index: 1, kind: input, shape index: {}]
  %s2 = inlined_call_operand.vmem [shape: f32[12,32], index: 2, kind: output, shape index: {}]
  %s3 = sld [smem:[#allocation0]]
  $region26: #{msthn_forward.7} parent=0
    _
  %s5 = ssub.s32 1, %s3
  %s6 = scalar_select 0, %s5, %s3
  // Predicated region
  $region2: #{msthn_forward.7} parent=0 // pred_check
    _
  $region3: #{msthn_forward.7} parent=0 // pred_check_branch
    %8 = sbr.rel (0) target = $region5
  $region4: #{msthn_forward.7} parent=0 // pred_region
    _
  $region5: #{msthn_forward.7} parent=0 // pred_fallthru
    _
  // Predicated region
  $region6: #{msthn_forward.7} parent=0 // pred_check
    _
  $region7: #{msthn_forward.7} parent=0 // pred_check_branch
    %10 = sbr.rel (0) target = $region9
  $region8: #{msthn_forward.7} parent=0 // pred_region
    _
  $region9: #{msthn_forward.7} parent=0 // pred_fallthru
    _
  %p12 = scmp.eq.s32.totalorder 0, 0
  // Predicated region
  $region10: #{msthn_forward.7} parent=0 // pred_check
    %p13 = pneg %p12
  $region11: #{msthn_forward.7} parent=0 // pred_check_branch
    %15 = sbr.rel (%p13) target = $region13
  $region12: #{msthn_forward.7} parent=0 // pred_region
    %vm16 = vcmask 261120
    %17 = vst.msk [vmem:[#allocation2] sm:$0xff] %vm16, 0.0
    %vm18 = vcmask 257024
    %19 = vst.msk [vmem:[#allocation2 + $0x8] sm:$0xf] %vm18, 0.0
  $region13: #{msthn_forward.7} parent=0 // pred_fallthru
    _
  %v20 = vld [vmem:[#allocation2] sm:$0xff]
  %v21 = vld [vmem:[#allocation2 + $0x8] sm:$0xf]
  %v22 = vld [vmem:[%s0] sm:$0xf]
  %v23 = vld [vmem:[%s0 + $0x4] sm:$0x3]
  %v24 = vld [vmem:[%s1] sm:$0xf]
  %v25 = vld [vmem:[%s1 + $0x4] sm:$0x3]
  %v28 = vunpack.c.l.b16 %v22
  %v29 = vunpack.c.l.b16 %v23
  %v30 = vpack.c.b16 %v29, %v28
  %v33 = vunpack.c.l.b16 %v24
  %v34 = vunpack.c.l.b16 %v25
  %v35 = vpack.c.b16 %v34, %v33
  %vm36 = vcmask 97280
  %v38 = vsel %vm36, %v30, 0
  %vm40 = vcmask 1045504
  %v42 = vsel %vm40, %v35, 0
  %44 = vmatprep.subr.bf16.mxu0 0
  %45 = vmatpush1.bf16.msra.mxu0 0
  %46 = vmatprep.subr.bf16.mxu0 0
  %47 = vmatpush1.bf16.msra.mxu0 0
  %48 = vmatprep.subr.bf16.mxu0 0
  %49 = vmatpush1.bf16.msra.mxu0 0
  %50 = vmatprep.subr.bf16.mxu0 0
  %51 = vmatpush1.bf16.msra.mxu0 0
  %52 = vmatprep.subr.bf16.mxu0 0
  %53 = vmatpush1.bf16.msra.mxu0 0
  %54 = vmatprep.subr.bf16.mxu0 0
  %55 = vmatpush1.bf16.msra.mxu0 0
  %56 = vmatprep.subr.bf16.mxu0 0
  %57 = vmatpush1.bf16.msra.mxu0 0
  %58 = vmatprep.subr.bf16.mxu0 0
  %59 = vmatpush1.bf16.msra.mxu0 %v42
  %60 = vmatprep.subr.bf16.mxu0 0
  %61 = vmatpush2.bf16.msra.mxu0 0
  %62 = vmatprep.subr.bf16.mxu0 0
  %63 = vmatpush2.bf16.msra.mxu0 0
  %64 = vmatprep.subr.bf16.mxu0 0
  %65 = vmatpush2.bf16.msra.mxu0 0
  %66 = vmatprep.subr.bf16.mxu0 0
  %67 = vmatpush2.bf16.msra.mxu0 0
  %68 = vmatprep.subr.bf16.mxu0 0
  %69 = vmatpush2.bf16.msra.mxu0 0
  %70 = vmatprep.subr.bf16.mxu0 0
  %71 = vmatpush2.bf16.msra.mxu0 0
  %72 = vmatprep.subr.bf16.mxu0 0
  %73 = vmatpush2.bf16.msra.mxu0 0
  %74 = vmatprep.subr.bf16.mxu0 0
  %75 = vmatpush2.bf16.msra.mxu0 0
  %76 = vmatprep.mubr.bf16.mxu0 0
  %77 = vmatmul.mubr.bf16.gmra.mxu0 %v38
  %v78 = vpop.f32.mrf.mxu0
  %v79 = vadd.f32 0.0, %v78
  %v80 = vpop.f32.mrf.mxu0
  %v81 = vpop.f32.mrf.mxu0
  %v82 = vadd.f32 0.0, %v81
  %v83 = vpop.f32.mrf.mxu0
  %84 = vdwg.mxu0
  %v85 = vadd.f32 %v20, %v79
  %v86 = vadd.f32 %v21, %v82
  %vm87 = vcmask 261120
  %88 = vst.msk [vmem:[#allocation2] sm:$0xff] %vm87, %v85
  %vm89 = vcmask 257024
  %90 = vst.msk [vmem:[#allocation2 + $0x8] sm:$0xf] %vm89, %v86
  // Predicated region
  $region14: #{msthn_forward.7} parent=0 // pred_check
    %p91 = pneg %p12
  $region15: #{msthn_forward.7} parent=0 // pred_check_branch
    %93 = sbr.rel (%p91) target = $region17
  $region16: #{msthn_forward.7} parent=0 // pred_region
    %v94 = vld [vmem:[#allocation2] sm:$0xff]
    %v95 = vld [vmem:[#allocation2 + $0x8] sm:$0xf]
    %96 = vst.msk [vmem:[%s2] sm:$0xff] %vm87, %v94
    %97 = vst.msk [vmem:[%s2 + $0x8] sm:$0xf] %vm89, %v95
  $region17: #{msthn_forward.7} parent=0 // pred_fallthru
    _
  // Predicated region
  $region18: #{msthn_forward.7} parent=0 // pred_check
    _
  $region19: #{msthn_forward.7} parent=0 // pred_check_branch
    %99 = sbr.rel (0) target = $region21
  $region20: #{msthn_forward.7} parent=0 // pred_region
    _
  $region21: #{msthn_forward.7} parent=0 // pred_fallthru
    _
  // Predicated region
  $region22: #{msthn_forward.7} parent=0 // pred_check
    _
  $region23: #{msthn_forward.7} parent=0 // pred_check_branch
    %101 = sbr.rel (0) target = $region25
  $region24: #{msthn_forward.7} parent=0 // pred_region
    _
  $region25: #{msthn_forward.7} parent=0 // pred_fallthru
    _

// kernel: msthn_forward.6
$region0: #{msthn_forward.6}
  #allocation0 [shape = 'u32[]', space=smem, size = 0x4, offset = 0x4, fixed_abs, tag = 'smem constant byte address 0x4 - core index']
  #allocation1 [shape = 'u32[144,128]{1,0:T(1,128)}', space=vmem, size = 0x12000, scoped, tag = 'internal scratch']
  %s0 = inlined_call_operand.vmem [shape: f32[2,8,32], index: 0, kind: input, shape index: {}]
  %s1 = inlined_call_operand.vmem [shape: f32[2,8,32], index: 1, kind: input, shape index: {}]
  %s2 = inlined_call_operand.vmem [shape: f32[2,8,8], index: 2, kind: input, shape index: {}]
  %s3 = inlined_call_operand.vmem [shape: f32[32,32], index: 3, kind: input, shape index: {}]
  %s4 = inlined_call_operand.vmem [shape: f32[1,32], index: 4, kind: input, shape index: {}]
  %s5 = inlined_call_operand.vmem [shape: f32[32,96], index: 5, kind: input, shape index: {}]
  %s6 = inlined_call_operand.vmem [shape: f32[1,96], index: 6, kind: input, shape index: {}]
  %s7 = inlined_call_operand.vmem [shape: f32[32,32], index: 7, kind: input, shape index: {}]
  %s8 = inlined_call_operand.vmem [shape: f32[1,32], index: 8, kind: input, shape index: {}]
  %s9 = inlined_call_operand.vmem [shape: f32[2,32], index: 9, kind: output, shape index: {}]
  %s10 = sld [smem:[#allocation0]]
  $region46: #{msthn_forward.6} parent=0
    _
  %s12 = ssub.s32 1, %s10
  %s13 = scalar_select 0, %s12, %s10
  // Predicated region
  $region2: #{msthn_forward.6} parent=0 // pred_check
    _
  $region3: #{msthn_forward.6} parent=0 // pred_check_branch
    %15 = sbr.rel (0) target = $region5
  $region4: #{msthn_forward.6} parent=0 // pred_region
    _
  $region5: #{msthn_forward.6} parent=0 // pred_fallthru
    _
  // Predicated region
  $region6: #{msthn_forward.6} parent=0 // pred_check
    _
  $region7: #{msthn_forward.6} parent=0 // pred_check_branch
    %17 = sbr.rel (0) target = $region9
  $region8: #{msthn_forward.6} parent=0 // pred_region
    _
  $region9: #{msthn_forward.6} parent=0 // pred_fallthru
    _
  // Predicated region
  $region10: #{msthn_forward.6} parent=0 // pred_check
    _
  $region11: #{msthn_forward.6} parent=0 // pred_check_branch
    %19 = sbr.rel (0) target = $region13
  $region12: #{msthn_forward.6} parent=0 // pred_region
    _
  $region13: #{msthn_forward.6} parent=0 // pred_fallthru
    _
  // Predicated region
  $region14: #{msthn_forward.6} parent=0 // pred_check
    _
  $region15: #{msthn_forward.6} parent=0 // pred_check_branch
    %21 = sbr.rel (0) target = $region17
  $region16: #{msthn_forward.6} parent=0 // pred_region
    _
  $region17: #{msthn_forward.6} parent=0 // pred_fallthru
    _
  // Predicated region
  $region18: #{msthn_forward.6} parent=0 // pred_check
    _
  $region19: #{msthn_forward.6} parent=0 // pred_check_branch
    %23 = sbr.rel (0) target = $region21
  $region20: #{msthn_forward.6} parent=0 // pred_region
    _
  $region21: #{msthn_forward.6} parent=0 // pred_fallthru
    _
  // Predicated region
  $region22: #{msthn_forward.6} parent=0 // pred_check
    _
  $region23: #{msthn_forward.6} parent=0 // pred_check_branch
    %25 = sbr.rel (0) target = $region25
  $region24: #{msthn_forward.6} parent=0 // pred_region
    _
  $region25: #{msthn_forward.6} parent=0 // pred_fallthru
    _
  // Predicated region
  $region26: #{msthn_forward.6} parent=0 // pred_check
    _
  $region27: #{msthn_forward.6} parent=0 // pred_check_branch
    %27 = sbr.rel (0) target = $region29
  $region28: #{msthn_forward.6} parent=0 // pred_region
    _
  $region29: #{msthn_forward.6} parent=0 // pred_fallthru
    _
  // Predicated region
  $region30: #{msthn_forward.6} parent=0 // pred_check
    _
  $region31: #{msthn_forward.6} parent=0 // pred_check_branch
    %29 = sbr.rel (0) target = $region33
  $region32: #{msthn_forward.6} parent=0 // pred_region
    _
  $region33: #{msthn_forward.6} parent=0 // pred_fallthru
    _
  // Predicated region
  $region34: #{msthn_forward.6} parent=0 // pred_check
    _
  $region35: #{msthn_forward.6} parent=0 // pred_check_branch
    %31 = sbr.rel (0) target = $region37
  $region36: #{msthn_forward.6} parent=0 // pred_region
    _
  $region37: #{msthn_forward.6} parent=0 // pred_fallthru
    _
  %v32 = vld [vmem:[%s0] sm:$0xff]
  %v33 = vld [vmem:[%s0 + $0x8] sm:$0xff]
  %v34 = vld [vmem:[%s1] sm:$0xff]
  %v35 = vld [vmem:[%s1 + $0x8] sm:$0xff]
  %v36 = vld [vmem:[%s2] sm:$0xff]
  %v37 = vld [vmem:[%s2 + $0x8] sm:$0xff]
  %vm38 = vcmask 64512
  %v40 = vsel %vm38, %v36, 0
  %42 = vmatprep.subr.mxu0 0.0
  %43 = vmatpush1.msra.mxu0 0.0
  %44 = vmatprep.subr.mxu0 0.0
  %45 = vmatpush1.msra.mxu0 0.0
  %46 = vmatprep.subr.mxu0 0.0
  %47 = vmatpush1.msra.mxu0 0.0
  %48 = vmatprep.subr.mxu0 0.0
  %49 = vmatpush1.msra.mxu0 0.0
  %50 = vmatprep.subr.mxu0 0.0
  %51 = vmatpush1.msra.mxu0 0.0
  %52 = vmatprep.subr.mxu0 0.0
  %53 = vmatpush1.msra.mxu0 0.0
  %54 = vmatprep.subr.mxu0 0.0
  %55 = vmatpush1.msra.mxu0 0.0
  %56 = vmatprep.subr.mxu0 0.0
  %57 = vmatpush1.msra.mxu0 0.0
  %58 = vmatprep.subr.mxu0 0.0
  %59 = vmatpush1.msra.mxu0 0.0
  %60 = vmatprep.subr.mxu0 0.0
  %61 = vmatpush1.msra.mxu0 0.0
  %62 = vmatprep.subr.mxu0 0.0
  %63 = vmatpush1.msra.mxu0 0.0
  %64 = vmatprep.subr.mxu0 0.0
  %65 = vmatpush1.msra.mxu0 0.0
  %66 = vmatprep.subr.mxu0 0.0
  %67 = vmatpush1.msra.mxu0 0.0
  %68 = vmatprep.subr.mxu0 0.0
  %69 = vmatpush1.msra.mxu0 0.0
  %70 = vmatprep.subr.mxu0 0.0
  %71 = vmatpush1.msra.mxu0 0.0
  %72 = vmatprep.subr.mxu0 0.0
  %73 = vmatpush1.msra.mxu0 %v32
  %74 = vmatprep.subr.mxu0 0.0
  %75 = vmatpush2.msra.mxu0 0.0
  %76 = vmatprep.subr.mxu0 0.0
  %77 = vmatpush2.msra.mxu0 0.0
  %78 = vmatprep.subr.mxu0 0.0
  %79 = vmatpush2.msra.mxu0 0.0
  %80 = vmatprep.subr.mxu0 0.0
  %81 = vmatpush2.msra.mxu0 0.0
  %82 = vmatprep.subr.mxu0 0.0
  %83 = vmatpush2.msra.mxu0 0.0
  %84 = vmatprep.subr.mxu0 0.0
  %85 = vmatpush2.msra.mxu0 0.0
  %86 = vmatprep.subr.mxu0 0.0
  %87 = vmatpush2.msra.mxu0 0.0
  %88 = vmatprep.subr.mxu0 0.0
  %89 = vmatpush2.msra.mxu0 0.0
  %90 = vmatprep.subr.mxu0 0.0
  %91 = vmatpush2.msra.mxu0 0.0
  %92 = vmatprep.subr.mxu0 0.0
  %93 = vmatpush2.msra.mxu0 0.0
  %94 = vmatprep.subr.mxu0 0.0
  %95 = vmatpush2.msra.mxu0 0.0
  %96 = vmatprep.subr.mxu0 0.0
  %97 = vmatpush2.msra.mxu0 0.0
  %98 = vmatprep.subr.mxu0 0.0
  %99 = vmatpush2.msra.mxu0 0.0
  %100 = vmatprep.subr.mxu0 0.0
  %101 = vmatpush2.msra.mxu0 0.0
  %102 = vmatprep.subr.mxu0 0.0
  %103 = vmatpush2.msra.mxu0 0.0
  %104 = vmatprep.subr.mxu0 0.0
  %105 = vmatpush2.msra.mxu0 0.0
  %106 = vmatprep.mubr.f32.mxu0 0.0
  %107 = vmatmul.mubr.f32.gmra.mxu0 %v40
  %v108 = vpop.f32.mrf.mxu0
  %v109 = vadd.f32 0.0, %v108
  %v110 = vpop.f32.mrf.mxu0
  %111 = vdwg.mxu0
  %v113 = vsel %vm38, %v37, 0
  %115 = vmatprep.subr.mxu0 0.0
  %116 = vmatpush1.msra.mxu0 0.0
  %117 = vmatprep.subr.mxu0 0.0
  %118 = vmatpush1.msra.mxu0 0.0
  %119 = vmatprep.subr.mxu0 0.0
  %120 = vmatpush1.msra.mxu0 0.0
  %121 = vmatprep.subr.mxu0 0.0
  %122 = vmatpush1.msra.mxu0 0.0
  %123 = vmatprep.subr.mxu0 0.0
  %124 = vmatpush1.msra.mxu0 0.0
  %125 = vmatprep.subr.mxu0 0.0
  %126 = vmatpush1.msra.mxu0 0.0
  %127 = vmatprep.subr.mxu0 0.0
  %128 = vmatpush1.msra.mxu0 0.0
  %129 = vmatprep.subr.mxu0 0.0
  %130 = vmatpush1.msra.mxu0 0.0
  %131 = vmatprep.subr.mxu0 0.0
  %132 = vmatpush1.msra.mxu0 0.0
  %133 = vmatprep.subr.mxu0 0.0
  %134 = vmatpush1.msra.mxu0 0.0
  %135 = vmatprep.subr.mxu0 0.0
  %136 = vmatpush1.msra.mxu0 0.0
  %137 = vmatprep.subr.mxu0 0.0
  %138 = vmatpush1.msra.mxu0 0.0
  %139 = vmatprep.subr.mxu0 0.0
  %140 = vmatpush1.msra.mxu0 0.0
  %141 = vmatprep.subr.mxu0 0.0
  %142 = vmatpush1.msra.mxu0 0.0
  %143 = vmatprep.subr.mxu0 0.0
  %144 = vmatpush1.msra.mxu0 0.0
  %145 = vmatprep.subr.mxu0 0.0
  %146 = vmatpush1.msra.mxu0 %v33
  %147 = vmatprep.subr.mxu0 0.0
  %148 = vmatpush2.msra.mxu0 0.0
  %149 = vmatprep.subr.mxu0 0.0
  %150 = vmatpush2.msra.mxu0 0.0
  %151 = vmatprep.subr.mxu0 0.0
  %152 = vmatpush2.msra.mxu0 0.0
  %153 = vmatprep.subr.mxu0 0.0
  %154 = vmatpush2.msra.mxu0 0.0
  %155 = vmatprep.subr.mxu0 0.0
  %156 = vmatpush2.msra.mxu0 0.0
  %157 = vmatprep.subr.mxu0 0.0
  %158 = vmatpush2.msra.mxu0 0.0
  %159 = vmatprep.subr.mxu0 0.0
  %160 = vmatpush2.msra.mxu0 0.0
  %161 = vmatprep.subr.mxu0 0.0
  %162 = vmatpush2.msra.mxu0 0.0
  %163 = vmatprep.subr.mxu0 0.0
  %164 = vmatpush2.msra.mxu0 0.0
  %165 = vmatprep.subr.mxu0 0.0
  %166 = vmatpush2.msra.mxu0 0.0
  %167 = vmatprep.subr.mxu0 0.0
  %168 = vmatpush2.msra.mxu0 0.0
  %169 = vmatprep.subr.mxu0 0.0
  %170 = vmatpush2.msra.mxu0 0.0
  %171 = vmatprep.subr.mxu0 0.0
  %172 = vmatpush2.msra.mxu0 0.0
  %173 = vmatprep.subr.mxu0 0.0
  %174 = vmatpush2.msra.mxu0 0.0
  %175 = vmatprep.subr.mxu0 0.0
  %176 = vmatpush2.msra.mxu0 0.0
  %177 = vmatprep.subr.mxu0 0.0
  %178 = vmatpush2.msra.mxu0 0.0
  %179 = vmatprep.mubr.f32.mxu0 0.0
  %180 = vmatmul.mubr.f32.gmra.mxu0 %v113
  %v181 = vpop.f32.mrf.mxu0
  %v182 = vadd.f32 0.0, %v181
  %v183 = vpop.f32.mrf.mxu0
  %184 = vdwg.mxu0
  %v185 = vld [vmem:[%s3] sm:$0xff]
  %v186 = vld [vmem:[%s3 + $0x8] sm:$0xff]
  %v187 = vld [vmem:[%s3 + $0x10] sm:$0xff]
  %v188 = vld [vmem:[%s3 + $0x18] sm:$0xff]
  %v189 = vld [vmem:[%s4] sm:$0x1]
  %v191 = vlaneseq
  %v192 = vshrl.u32 %v191, 7
  %v193 = vsub.s32 0, %v192
  %v194 = vrot.slane %v189, %v193
  %vm196 = vcmask 261120
  %v198 = vsel %vm196, %v109, 0
  %v201 = vsel %vm196, %v182, 0
  %203 = vmatprep.subr.mxu0 0.0
  %204 = vmatpush1.msra.mxu0 0.0
  %205 = vmatprep.subr.mxu0 0.0
  %206 = vmatpush1.msra.mxu0 0.0
  %207 = vmatprep.subr.mxu0 0.0
  %208 = vmatpush1.msra.mxu0 0.0
  %209 = vmatprep.subr.mxu0 0.0
  %210 = vmatpush1.msra.mxu0 0.0
  %211 = vmatprep.subr.mxu0 0.0
  %212 = vmatpush1.msra.mxu0 0.0
  %213 = vmatprep.subr.mxu0 0.0
  %214 = vmatpush1.msra.mxu0 0.0
  %215 = vmatprep.subr.mxu0 0.0
  %216 = vmatpush1.msra.mxu0 0.0
  %217 = vmatprep.subr.mxu0 0.0
  %218 = vmatpush1.msra.mxu0 0.0
  %219 = vmatprep.subr.mxu0 0.0
  %220 = vmatpush1.msra.mxu0 0.0
  %221 = vmatprep.subr.mxu0 0.0
  %222 = vmatpush1.msra.mxu0 0.0
  %223 = vmatprep.subr.mxu0 0.0
  %224 = vmatpush1.msra.mxu0 0.0
  %225 = vmatprep.subr.mxu0 0.0
  %226 = vmatpush1.msra.mxu0 0.0
  %227 = vmatprep.subr.mxu0 0.0
  %228 = vmatpush1.msra.mxu0 %v188
  %229 = vmatprep.subr.mxu0 0.0
  %230 = vmatpush1.msra.mxu0 %v187
  %231 = vmatprep.subr.mxu0 0.0
  %232 = vmatpush1.msra.mxu0 %v186
  %233 = vmatprep.subr.mxu0 0.0
  %234 = vmatpush1.msra.mxu0 %v185
  %235 = vmatprep.subr.mxu0 0.0
  %236 = vmatpush2.msra.mxu0 0.0
  %237 = vmatprep.subr.mxu0 0.0
  %238 = vmatpush2.msra.mxu0 0.0
  %239 = vmatprep.subr.mxu0 0.0
  %240 = vmatpush2.msra.mxu0 0.0
  %241 = vmatprep.subr.mxu0 0.0
  %242 = vmatpush2.msra.mxu0 0.0
  %243 = vmatprep.subr.mxu0 0.0
  %244 = vmatpush2.msra.mxu0 0.0
  %245 = vmatprep.subr.mxu0 0.0
  %246 = vmatpush2.msra.mxu0 0.0
  %247 = vmatprep.subr.mxu0 0.0
  %248 = vmatpush2.msra.mxu0 0.0
  %249 = vmatprep.subr.mxu0 0.0
  %250 = vmatpush2.msra.mxu0 0.0
  %251 = vmatprep.subr.mxu0 0.0
  %252 = vmatpush2.msra.mxu0 0.0
  %253 = vmatprep.subr.mxu0 0.0
  %254 = vmatpush2.msra.mxu0 0.0
  %255 = vmatprep.subr.mxu0 0.0
  %256 = vmatpush2.msra.mxu0 0.0
  %257 = vmatprep.subr.mxu0 0.0
  %258 = vmatpush2.msra.mxu0 0.0
  %259 = vmatprep.subr.mxu0 0.0
  %260 = vmatpush2.msra.mxu0 0.0
  %261 = vmatprep.subr.mxu0 0.0
  %262 = vmatpush2.msra.mxu0 0.0
  %263 = vmatprep.subr.mxu0 0.0
  %264 = vmatpush2.msra.mxu0 0.0
  %265 = vmatprep.subr.mxu0 0.0
  %266 = vmatpush2.msra.mxu0 0.0
  %267 = vmatprep.mubr.f32.mxu0 0.0
  %268 = vmatmul.mubr.f32.gmra.mxu0 %v198
  %v269 = vpop.f32.mrf.mxu0
  %v270 = vadd.f32 %v194, %v269
  %v271 = vpop.f32.mrf.mxu0
  %272 = vmatprep.mubr.f32.mxu0 0.0
  %273 = vmatmul.mubr.f32.gmra.mxu0 %v201
  %v274 = vpop.f32.mrf.mxu0
  %v275 = vadd.f32 %v194, %v274
  %v276 = vpop.f32.mrf.mxu0
  %277 = vdwg.mxu0
  %v278 = vmax.f32 %v270, 0.0
  %v279 = vmax.f32 %v275, 0.0
  %v280 = vadd.f32 %v32, %v34
  %v281 = vadd.f32 %v33, %v35
  %v282 = vadd.f32 %v280, %v278
  %v283 = vadd.f32 %v281, %v279
  %v284 = vld [vmem:[%s5] sm:$0xff]
  %v285 = vld [vmem:[%s5 + $0x8] sm:$0xff]
  %v286 = vld [vmem:[%s5 + $0x10] sm:$0xff]
  %v287 = vld [vmem:[%s5 + $0x18] sm:$0xff]
  %v288 = vld [vmem:[%s6] sm:$0x1]
  %v290 = vlaneseq
  %v291 = vshrl.u32 %v290, 7
  %v292 = vsub.s32 0, %v291
  %v293 = vrot.slane %v288, %v292
  %v296 = vsel %vm196, %v282, 0
  %v299 = vsel %vm196, %v283, 0
  %301 = vmatprep.subr.mxu0 0.0
  %302 = vmatpush1.msra.mxu0 0.0
  %303 = vmatprep.subr.mxu0 0.0
  %304 = vmatpush1.msra.mxu0 0.0
  %305 = vmatprep.subr.mxu0 0.0
  %306 = vmatpush1.msra.mxu0 0.0
  %307 = vmatprep.subr.mxu0 0.0
  %308 = vmatpush1.msra.mxu0 0.0
  %309 = vmatprep.subr.mxu0 0.0
  %310 = vmatpush1.msra.mxu0 0.0
  %311 = vmatprep.subr.mxu0 0.0
  %312 = vmatpush1.msra.mxu0 0.0
  %313 = vmatprep.subr.mxu0 0.0
  %314 = vmatpush1.msra.mxu0 0.0
  %315 = vmatprep.subr.mxu0 0.0
  %316 = vmatpush1.msra.mxu0 0.0
  %317 = vmatprep.subr.mxu0 0.0
  %318 = vmatpush1.msra.mxu0 0.0
  %319 = vmatprep.subr.mxu0 0.0
  %320 = vmatpush1.msra.mxu0 0.0
  %321 = vmatprep.subr.mxu0 0.0
  %322 = vmatpush1.msra.mxu0 0.0
  %323 = vmatprep.subr.mxu0 0.0
  %324 = vmatpush1.msra.mxu0 0.0
  %325 = vmatprep.subr.mxu0 0.0
  %326 = vmatpush1.msra.mxu0 %v287
  %327 = vmatprep.subr.mxu0 0.0
  %328 = vmatpush1.msra.mxu0 %v286
  %329 = vmatprep.subr.mxu0 0.0
  %330 = vmatpush1.msra.mxu0 %v285
  %331 = vmatprep.subr.mxu0 0.0
  %332 = vmatpush1.msra.mxu0 %v284
  %333 = vmatprep.subr.mxu0 0.0
  %334 = vmatpush2.msra.mxu0 0.0
  %335 = vmatprep.subr.mxu0 0.0
  %336 = vmatpush2.msra.mxu0 0.0
  %337 = vmatprep.subr.mxu0 0.0
  %338 = vmatpush2.msra.mxu0 0.0
  %339 = vmatprep.subr.mxu0 0.0
  %340 = vmatpush2.msra.mxu0 0.0
  %341 = vmatprep.subr.mxu0 0.0
  %342 = vmatpush2.msra.mxu0 0.0
  %343 = vmatprep.subr.mxu0 0.0
  %344 = vmatpush2.msra.mxu0 0.0
  %345 = vmatprep.subr.mxu0 0.0
  %346 = vmatpush2.msra.mxu0 0.0
  %347 = vmatprep.subr.mxu0 0.0
  %348 = vmatpush2.msra.mxu0 0.0
  %349 = vmatprep.subr.mxu0 0.0
  %350 = vmatpush2.msra.mxu0 0.0
  %351 = vmatprep.subr.mxu0 0.0
  %352 = vmatpush2.msra.mxu0 0.0
  %353 = vmatprep.subr.mxu0 0.0
  %354 = vmatpush2.msra.mxu0 0.0
  %355 = vmatprep.subr.mxu0 0.0
  %356 = vmatpush2.msra.mxu0 0.0
  %357 = vmatprep.subr.mxu0 0.0
  %358 = vmatpush2.msra.mxu0 0.0
  %359 = vmatprep.subr.mxu0 0.0
  %360 = vmatpush2.msra.mxu0 0.0
  %361 = vmatprep.subr.mxu0 0.0
  %362 = vmatpush2.msra.mxu0 0.0
  %363 = vmatprep.subr.mxu0 0.0
  %364 = vmatpush2.msra.mxu0 0.0
  %365 = vmatprep.mubr.f32.mxu0 0.0
  %366 = vmatmul.mubr.f32.gmra.mxu0 %v296
  %v367 = vpop.f32.mrf.mxu0
  %v368 = vadd.f32 %v293, %v367
  %v369 = vpop.f32.mrf.mxu0
  %370 = vmatprep.mubr.f32.mxu0 0.0
  %371 = vmatmul.mubr.f32.gmra.mxu0 %v299
  %v372 = vpop.f32.mrf.mxu0
  %v373 = vadd.f32 %v293, %v372
  %v374 = vpop.f32.mrf.mxu0
  %375 = vdwg.mxu0
  %v376 = vmul.f32 %v368, 0.25
  %v377 = vmul.f32 %v373, 0.25
  %379 = vrot.lane.b32.xlu0 %v368, 96
  %v380 = vpop.permute.xlu0 %379
  %vm381 = vcmask 130048
  %v383 = vsel %vm381, %v376, 0
  %v385 = vsel %vm381, %v380, 0
  %387 = vmatprep.subr.mxu0 0.0
  %388 = vmatpush1.xpose.msra.mxu0 0.0
  %389 = vmatprep.subr.mxu0 0.0
  %390 = vmatpush1.xpose.msra.mxu0 0.0
  %391 = vmatprep.subr.mxu0 0.0
  %392 = vmatpush1.xpose.msra.mxu0 0.0
  %393 = vmatprep.subr.mxu0 0.0
  %394 = vmatpush1.xpose.msra.mxu0 0.0
  %395 = vmatprep.subr.mxu0 0.0
  %396 = vmatpush1.xpose.msra.mxu0 0.0
  %397 = vmatprep.subr.mxu0 0.0
  %398 = vmatpush1.xpose.msra.mxu0 0.0
  %399 = vmatprep.subr.mxu0 0.0
  %400 = vmatpush1.xpose.msra.mxu0 0.0
  %401 = vmatprep.subr.mxu0 0.0
  %402 = vmatpush1.xpose.msra.mxu0 0.0
  %403 = vmatprep.subr.mxu0 0.0
  %404 = vmatpush1.xpose.msra.mxu0 0.0
  %405 = vmatprep.subr.mxu0 0.0
  %406 = vmatpush1.xpose.msra.mxu0 0.0
  %407 = vmatprep.subr.mxu0 0.0
  %408 = vmatpush1.xpose.msra.mxu0 0.0
  %409 = vmatprep.subr.mxu0 0.0
  %410 = vmatpush1.xpose.msra.mxu0 0.0
  %411 = vmatprep.subr.mxu0 0.0
  %412 = vmatpush1.xpose.msra.mxu0 0.0
  %413 = vmatprep.subr.mxu0 0.0
  %414 = vmatpush1.xpose.msra.mxu0 0.0
  %415 = vmatprep.subr.mxu0 0.0
  %416 = vmatpush1.xpose.msra.mxu0 0.0
  %417 = vmatprep.subr.mxu0 0.0
  %418 = vmatpush1.xpose.msra.mxu0 %v385
  %419 = vmatprep.subr.mxu0 0.0
  %420 = vmatpush2.xpose.msra.mxu0 0.0
  %421 = vmatprep.subr.mxu0 0.0
  %422 = vmatpush2.xpose.msra.mxu0 0.0
  %423 = vmatprep.subr.mxu0 0.0
  %424 = vmatpush2.xpose.msra.mxu0 0.0
  %425 = vmatprep.subr.mxu0 0.0
  %426 = vmatpush2.xpose.msra.mxu0 0.0
  %427 = vmatprep.subr.mxu0 0.0
  %428 = vmatpush2.xpose.msra.mxu0 0.0
  %429 = vmatprep.subr.mxu0 0.0
  %430 = vmatpush2.xpose.msra.mxu0 0.0
  %431 = vmatprep.subr.mxu0 0.0
  %432 = vmatpush2.xpose.msra.mxu0 0.0
  %433 = vmatprep.subr.mxu0 0.0
  %434 = vmatpush2.xpose.msra.mxu0 0.0
  %435 = vmatprep.subr.mxu0 0.0
  %436 = vmatpush2.xpose.msra.mxu0 0.0
  %437 = vmatprep.subr.mxu0 0.0
  %438 = vmatpush2.xpose.msra.mxu0 0.0
  %439 = vmatprep.subr.mxu0 0.0
  %440 = vmatpush2.xpose.msra.mxu0 0.0
  %441 = vmatprep.subr.mxu0 0.0
  %442 = vmatpush2.xpose.msra.mxu0 0.0
  %443 = vmatprep.subr.mxu0 0.0
  %444 = vmatpush2.xpose.msra.mxu0 0.0
  %445 = vmatprep.subr.mxu0 0.0
  %446 = vmatpush2.xpose.msra.mxu0 0.0
  %447 = vmatprep.subr.mxu0 0.0
  %448 = vmatpush2.xpose.msra.mxu0 0.0
  %449 = vmatprep.subr.mxu0 0.0
  %450 = vmatpush2.xpose.msra.mxu0 0.0
  %451 = vmatprep.mubr.f32.mxu0 0.0
  %452 = vmatmul.mubr.f32.gmra.mxu0 %v383
  %v453 = vpop.f32.mrf.mxu0
  %v454 = vadd.f32 0.0, %v453
  %v455 = vpop.f32.mrf.mxu0
  %456 = vdwg.mxu0
  %458 = vrot.lane.b32.xlu0 %v373, 96
  %v459 = vpop.permute.xlu0 %458
  %v461 = vsel %vm381, %v377, 0
  %v463 = vsel %vm381, %v459, 0
  %465 = vmatprep.subr.mxu0 0.0
  %466 = vmatpush1.xpose.msra.mxu0 0.0
  %467 = vmatprep.subr.mxu0 0.0
  %468 = vmatpush1.xpose.msra.mxu0 0.0
  %469 = vmatprep.subr.mxu0 0.0
  %470 = vmatpush1.xpose.msra.mxu0 0.0
  %471 = vmatprep.subr.mxu0 0.0
  %472 = vmatpush1.xpose.msra.mxu0 0.0
  %473 = vmatprep.subr.mxu0 0.0
  %474 = vmatpush1.xpose.msra.mxu0 0.0
  %475 = vmatprep.subr.mxu0 0.0
  %476 = vmatpush1.xpose.msra.mxu0 0.0
  %477 = vmatprep.subr.mxu0 0.0
  %478 = vmatpush1.xpose.msra.mxu0 0.0
  %479 = vmatprep.subr.mxu0 0.0
  %480 = vmatpush1.xpose.msra.mxu0 0.0
  %481 = vmatprep.subr.mxu0 0.0
  %482 = vmatpush1.xpose.msra.mxu0 0.0
  %483 = vmatprep.subr.mxu0 0.0
  %484 = vmatpush1.xpose.msra.mxu0 0.0
  %485 = vmatprep.subr.mxu0 0.0
  %486 = vmatpush1.xpose.msra.mxu0 0.0
  %487 = vmatprep.subr.mxu0 0.0
  %488 = vmatpush1.xpose.msra.mxu0 0.0
  %489 = vmatprep.subr.mxu0 0.0
  %490 = vmatpush1.xpose.msra.mxu0 0.0
  %491 = vmatprep.subr.mxu0 0.0
  %492 = vmatpush1.xpose.msra.mxu0 0.0
  %493 = vmatprep.subr.mxu0 0.0
  %494 = vmatpush1.xpose.msra.mxu0 0.0
  %495 = vmatprep.subr.mxu0 0.0
  %496 = vmatpush1.xpose.msra.mxu0 %v463
  %497 = vmatprep.subr.mxu0 0.0
  %498 = vmatpush2.xpose.msra.mxu0 0.0
  %499 = vmatprep.subr.mxu0 0.0
  %500 = vmatpush2.xpose.msra.mxu0 0.0
  %501 = vmatprep.subr.mxu0 0.0
  %502 = vmatpush2.xpose.msra.mxu0 0.0
  %503 = vmatprep.subr.mxu0 0.0
  %504 = vmatpush2.xpose.msra.mxu0 0.0
  %505 = vmatprep.subr.mxu0 0.0
  %506 = vmatpush2.xpose.msra.mxu0 0.0
  %507 = vmatprep.subr.mxu0 0.0
  %508 = vmatpush2.xpose.msra.mxu0 0.0
  %509 = vmatprep.subr.mxu0 0.0
  %510 = vmatpush2.xpose.msra.mxu0 0.0
  %511 = vmatprep.subr.mxu0 0.0
  %512 = vmatpush2.xpose.msra.mxu0 0.0
  %513 = vmatprep.subr.mxu0 0.0
  %514 = vmatpush2.xpose.msra.mxu0 0.0
  %515 = vmatprep.subr.mxu0 0.0
  %516 = vmatpush2.xpose.msra.mxu0 0.0
  %517 = vmatprep.subr.mxu0 0.0
  %518 = vmatpush2.xpose.msra.mxu0 0.0
  %519 = vmatprep.subr.mxu0 0.0
  %520 = vmatpush2.xpose.msra.mxu0 0.0
  %521 = vmatprep.subr.mxu0 0.0
  %522 = vmatpush2.xpose.msra.mxu0 0.0
  %523 = vmatprep.subr.mxu0 0.0
  %524 = vmatpush2.xpose.msra.mxu0 0.0
  %525 = vmatprep.subr.mxu0 0.0
  %526 = vmatpush2.xpose.msra.mxu0 0.0
  %527 = vmatprep.subr.mxu0 0.0
  %528 = vmatpush2.xpose.msra.mxu0 0.0
  %529 = vmatprep.mubr.f32.mxu0 0.0
  %530 = vmatmul.mubr.f32.gmra.mxu0 %v461
  %v531 = vpop.f32.mrf.mxu0
  %v532 = vadd.f32 0.0, %v531
  %v533 = vpop.f32.mrf.mxu0
  %534 = vdwg.mxu0
  %v535 = vsel %vm38, %v454, -inf
  %536 = vmax.xlane.f32.xlu0 %v535
  %v537 = vpop.xlane.xlu0 %536
  %v538 = vsel %vm38, %v532, -inf
  %539 = vmax.xlane.f32.xlu0 %v538
  %v540 = vpop.xlane.xlu0 %539
  %v541 = vsub.f32 %v454, %v537
  %v542 = vsub.f32 %v532, %v540
  %v543 = vmul.f32 %v541, 1.442695
  %v544 = vpow.pop %v543
  %v545 = vmul.f32 %v542, 1.442695
  %v546 = vpow.pop %v545
  %v547 = vsel %vm38, %v544, 0.0
  %548 = vadd.xlane.f32.xlu0 %v547
  %v549 = vpop.xlane.xlu0 %548
  %v550 = vsel %vm38, %v546, 0.0
  %551 = vadd.xlane.f32.xlu0 %v550
  %v552 = vpop.xlane.xlu0 %551
  %v553 = vrcp.pop %v549
  %v554 = vmul.f32 %v544, %v553
  %v555 = vrcp.pop %v552
  %v556 = vmul.f32 %v546, %v555
  %557 = vrot.lane.b32.xlu0 %v368, 64
  %v558 = vpop.permute.xlu0 %557
  %v561 = vsel %vm38, %v554, 0
  %563 = vmatprep.subr.mxu0 0.0
  %564 = vmatpush1.msra.mxu0 0.0
  %565 = vmatprep.subr.mxu0 0.0
  %566 = vmatpush1.msra.mxu0 0.0
  %567 = vmatprep.subr.mxu0 0.0
  %568 = vmatpush1.msra.mxu0 0.0
  %569 = vmatprep.subr.mxu0 0.0
  %570 = vmatpush1.msra.mxu0 0.0
  %571 = vmatprep.subr.mxu0 0.0
  %572 = vmatpush1.msra.mxu0 0.0
  %573 = vmatprep.subr.mxu0 0.0
  %574 = vmatpush1.msra.mxu0 0.0
  %575 = vmatprep.subr.mxu0 0.0
  %576 = vmatpush1.msra.mxu0 0.0
  %577 = vmatprep.subr.mxu0 0.0
  %578 = vmatpush1.msra.mxu0 0.0
  %579 = vmatprep.subr.mxu0 0.0
  %580 = vmatpush1.msra.mxu0 0.0
  %581 = vmatprep.subr.mxu0 0.0
  %582 = vmatpush1.msra.mxu0 0.0
  %583 = vmatprep.subr.mxu0 0.0
  %584 = vmatpush1.msra.mxu0 0.0
  %585 = vmatprep.subr.mxu0 0.0
  %586 = vmatpush1.msra.mxu0 0.0
  %587 = vmatprep.subr.mxu0 0.0
  %588 = vmatpush1.msra.mxu0 0.0
  %589 = vmatprep.subr.mxu0 0.0
  %590 = vmatpush1.msra.mxu0 0.0
  %591 = vmatprep.subr.mxu0 0.0
  %592 = vmatpush1.msra.mxu0 0.0
  %593 = vmatprep.subr.mxu0 0.0
  %594 = vmatpush1.msra.mxu0 %v558
  %595 = vmatprep.subr.mxu0 0.0
  %596 = vmatpush2.msra.mxu0 0.0
  %597 = vmatprep.subr.mxu0 0.0
  %598 = vmatpush2.msra.mxu0 0.0
  %599 = vmatprep.subr.mxu0 0.0
  %600 = vmatpush2.msra.mxu0 0.0
  %601 = vmatprep.subr.mxu0 0.0
  %602 = vmatpush2.msra.mxu0 0.0
  %603 = vmatprep.subr.mxu0 0.0
  %604 = vmatpush2.msra.mxu0 0.0
  %605 = vmatprep.subr.mxu0 0.0
  %606 = vmatpush2.msra.mxu0 0.0
  %607 = vmatprep.subr.mxu0 0.0
  %608 = vmatpush2.msra.mxu0 0.0
  %609 = vmatprep.subr.mxu0 0.0
  %610 = vmatpush2.msra.mxu0 0.0
  %611 = vmatprep.subr.mxu0 0.0
  %612 = vmatpush2.msra.mxu0 0.0
  %613 = vmatprep.subr.mxu0 0.0
  %614 = vmatpush2.msra.mxu0 0.0
  %615 = vmatprep.subr.mxu0 0.0
  %616 = vmatpush2.msra.mxu0 0.0
  %617 = vmatprep.subr.mxu0 0.0
  %618 = vmatpush2.msra.mxu0 0.0
  %619 = vmatprep.subr.mxu0 0.0
  %620 = vmatpush2.msra.mxu0 0.0
  %621 = vmatprep.subr.mxu0 0.0
  %622 = vmatpush2.msra.mxu0 0.0
  %623 = vmatprep.subr.mxu0 0.0
  %624 = vmatpush2.msra.mxu0 0.0
  %625 = vmatprep.subr.mxu0 0.0
  %626 = vmatpush2.msra.mxu0 0.0
  %627 = vmatprep.mubr.f32.mxu0 0.0
  %628 = vmatmul.mubr.f32.gmra.mxu0 %v561
  %v629 = vpop.f32.mrf.mxu0
  %v630 = vadd.f32 0.0, %v629
  %v631 = vpop.f32.mrf.mxu0
  %632 = vdwg.mxu0
  %633 = vrot.lane.b32.xlu0 %v373, 64
  %v634 = vpop.permute.xlu0 %633
  %v637 = vsel %vm38, %v556, 0
  %639 = vmatprep.subr.mxu0 0.0
  %640 = vmatpush1.msra.mxu0 0.0
  %641 = vmatprep.subr.mxu0 0.0
  %642 = vmatpush1.msra.mxu0 0.0
  %643 = vmatprep.subr.mxu0 0.0
  %644 = vmatpush1.msra.mxu0 0.0
  %645 = vmatprep.subr.mxu0 0.0
  %646 = vmatpush1.msra.mxu0 0.0
  %647 = vmatprep.subr.mxu0 0.0
  %648 = vmatpush1.msra.mxu0 0.0
  %649 = vmatprep.subr.mxu0 0.0
  %650 = vmatpush1.msra.mxu0 0.0
  %651 = vmatprep.subr.mxu0 0.0
  %652 = vmatpush1.msra.mxu0 0.0
  %653 = vmatprep.subr.mxu0 0.0
  %654 = vmatpush1.msra.mxu0 0.0
  %655 = vmatprep.subr.mxu0 0.0
  %656 = vmatpush1.msra.mxu0 0.0
  %657 = vmatprep.subr.mxu0 0.0
  %658 = vmatpush1.msra.mxu0 0.0
  %659 = vmatprep.subr.mxu0 0.0
  %660 = vmatpush1.msra.mxu0 0.0
  %661 = vmatprep.subr.mxu0 0.0
  %662 = vmatpush1.msra.mxu0 0.0
  %663 = vmatprep.subr.mxu0 0.0
  %664 = vmatpush1.msra.mxu0 0.0
  %665 = vmatprep.subr.mxu0 0.0
  %666 = vmatpush1.msra.mxu0 0.0
  %667 = vmatprep.subr.mxu0 0.0
  %668 = vmatpush1.msra.mxu0 0.0
  %669 = vmatprep.subr.mxu0 0.0
  %670 = vmatpush1.msra.mxu0 %v634
  %671 = vmatprep.subr.mxu0 0.0
  %672 = vmatpush2.msra.mxu0 0.0
  %673 = vmatprep.subr.mxu0 0.0
  %674 = vmatpush2.msra.mxu0 0.0
  %675 = vmatprep.subr.mxu0 0.0
  %676 = vmatpush2.msra.mxu0 0.0
  %677 = vmatprep.subr.mxu0 0.0
  %678 = vmatpush2.msra.mxu0 0.0
  %679 = vmatprep.subr.mxu0 0.0
  %680 = vmatpush2.msra.mxu0 0.0
  %681 = vmatprep.subr.mxu0 0.0
  %682 = vmatpush2.msra.mxu0 0.0
  %683 = vmatprep.subr.mxu0 0.0
  %684 = vmatpush2.msra.mxu0 0.0
  %685 = vmatprep.subr.mxu0 0.0
  %686 = vmatpush2.msra.mxu0 0.0
  %687 = vmatprep.subr.mxu0 0.0
  %688 = vmatpush2.msra.mxu0 0.0
  %689 = vmatprep.subr.mxu0 0.0
  %690 = vmatpush2.msra.mxu0 0.0
  %691 = vmatprep.subr.mxu0 0.0
  %692 = vmatpush2.msra.mxu0 0.0
  %693 = vmatprep.subr.mxu0 0.0
  %694 = vmatpush2.msra.mxu0 0.0
  %695 = vmatprep.subr.mxu0 0.0
  %696 = vmatpush2.msra.mxu0 0.0
  %697 = vmatprep.subr.mxu0 0.0
  %698 = vmatpush2.msra.mxu0 0.0
  %699 = vmatprep.subr.mxu0 0.0
  %700 = vmatpush2.msra.mxu0 0.0
  %701 = vmatprep.subr.mxu0 0.0
  %702 = vmatpush2.msra.mxu0 0.0
  %703 = vmatprep.mubr.f32.mxu0 0.0
  %704 = vmatmul.mubr.f32.gmra.mxu0 %v637
  %v705 = vpop.f32.mrf.mxu0
  %v706 = vadd.f32 0.0, %v705
  %v707 = vpop.f32.mrf.mxu0
  %708 = vdwg.mxu0
  %709 = vrot.lane.b32.xlu0 %v376, 112
  %v710 = vpop.permute.xlu0 %709
  %711 = vrot.lane.b32.xlu0 %v368, 80
  %v712 = vpop.permute.xlu0 %711
  %v713 = vsel %vm381, %v710, 0
  %v715 = vsel %vm381, %v712, 0
  %717 = vmatprep.subr.mxu0 0.0
  %718 = vmatpush1.xpose.msra.mxu0 0.0
  %719 = vmatprep.subr.mxu0 0.0
  %720 = vmatpush1.xpose.msra.mxu0 0.0
  %721 = vmatprep.subr.mxu0 0.0
  %722 = vmatpush1.xpose.msra.mxu0 0.0
  %723 = vmatprep.subr.mxu0 0.0
  %724 = vmatpush1.xpose.msra.mxu0 0.0
  %725 = vmatprep.subr.mxu0 0.0
  %726 = vmatpush1.xpose.msra.mxu0 0.0
  %727 = vmatprep.subr.mxu0 0.0
  %728 = vmatpush1.xpose.msra.mxu0 0.0
  %729 = vmatprep.subr.mxu0 0.0
  %730 = vmatpush1.xpose.msra.mxu0 0.0
  %731 = vmatprep.subr.mxu0 0.0
  %732 = vmatpush1.xpose.msra.mxu0 0.0
  %733 = vmatprep.subr.mxu0 0.0
  %734 = vmatpush1.xpose.msra.mxu0 0.0
  %735 = vmatprep.subr.mxu0 0.0
  %736 = vmatpush1.xpose.msra.mxu0 0.0
  %737 = vmatprep.subr.mxu0 0.0
  %738 = vmatpush1.xpose.msra.mxu0 0.0
  %739 = vmatprep.subr.mxu0 0.0
  %740 = vmatpush1.xpose.msra.mxu0 0.0
  %741 = vmatprep.subr.mxu0 0.0
  %742 = vmatpush1.xpose.msra.mxu0 0.0
  %743 = vmatprep.subr.mxu0 0.0
  %744 = vmatpush1.xpose.msra.mxu0 0.0
  %745 = vmatprep.subr.mxu0 0.0
  %746 = vmatpush1.xpose.msra.mxu0 0.0
  %747 = vmatprep.subr.mxu0 0.0
  %748 = vmatpush1.xpose.msra.mxu0 %v715
  %749 = vmatprep.subr.mxu0 0.0
  %750 = vmatpush2.xpose.msra.mxu0 0.0
  %751 = vmatprep.subr.mxu0 0.0
  %752 = vmatpush2.xpose.msra.mxu0 0.0
  %753 = vmatprep.subr.mxu0 0.0
  %754 = vmatpush2.xpose.msra.mxu0 0.0
  %755 = vmatprep.subr.mxu0 0.0
  %756 = vmatpush2.xpose.msra.mxu0 0.0
  %757 = vmatprep.subr.mxu0 0.0
  %758 = vmatpush2.xpose.msra.mxu0 0.0
  %759 = vmatprep.subr.mxu0 0.0
  %760 = vmatpush2.xpose.msra.mxu0 0.0
  %761 = vmatprep.subr.mxu0 0.0
  %762 = vmatpush2.xpose.msra.mxu0 0.0
  %763 = vmatprep.subr.mxu0 0.0
  %764 = vmatpush2.xpose.msra.mxu0 0.0
  %765 = vmatprep.subr.mxu0 0.0
  %766 = vmatpush2.xpose.msra.mxu0 0.0
  %767 = vmatprep.subr.mxu0 0.0
  %768 = vmatpush2.xpose.msra.mxu0 0.0
  %769 = vmatprep.subr.mxu0 0.0
  %770 = vmatpush2.xpose.msra.mxu0 0.0
  %771 = vmatprep.subr.mxu0 0.0
  %772 = vmatpush2.xpose.msra.mxu0 0.0
  %773 = vmatprep.subr.mxu0 0.0
  %774 = vmatpush2.xpose.msra.mxu0 0.0
  %775 = vmatprep.subr.mxu0 0.0
  %776 = vmatpush2.xpose.msra.mxu0 0.0
  %777 = vmatprep.subr.mxu0 0.0
  %778 = vmatpush2.xpose.msra.mxu0 0.0
  %779 = vmatprep.subr.mxu0 0.0
  %780 = vmatpush2.xpose.msra.mxu0 0.0
  %781 = vmatprep.mubr.f32.mxu0 0.0
  %782 = vmatmul.mubr.f32.gmra.mxu0 %v713
  %v783 = vpop.f32.mrf.mxu0
  %v784 = vadd.f32 0.0, %v783
  %v785 = vpop.f32.mrf.mxu0
  %786 = vdwg.mxu0
  %787 = vrot.lane.b32.xlu0 %v377, 112
  %v788 = vpop.permute.xlu0 %787
  %789 = vrot.lane.b32.xlu0 %v373, 80
  %v790 = vpop.permute.xlu0 %789
  %v791 = vsel %vm381, %v788, 0
  %v793 = vsel %vm381, %v790, 0
  %795 = vmatprep.subr.mxu0 0.0
  %796 = vmatpush1.xpose.msra.mxu0 0.0
  %797 = vmatprep.subr.mxu0 0.0
  %798 = vmatpush1.xpose.msra.mxu0 0.0
  %799 = vmatprep.subr.mxu0 0.0
  %800 = vmatpush1.xpose.msra.mxu0 0.0
  %801 = vmatprep.subr.mxu0 0.0
  %802 = vmatpush1.xpose.msra.mxu0 0.0
  %803 = vmatprep.subr.mxu0 0.0
  %804 = vmatpush1.xpose.msra.mxu0 0.0
  %805 = vmatprep.subr.mxu0 0.0
  %806 = vmatpush1.xpose.msra.mxu0 0.0
  %807 = vmatprep.subr.mxu0 0.0
  %808 = vmatpush1.xpose.msra.mxu0 0.0
  %809 = vmatprep.subr.mxu0 0.0
  %810 = vmatpush1.xpose.msra.mxu0 0.0
  %811 = vmatprep.subr.mxu0 0.0
  %812 = vmatpush1.xpose.msra.mxu0 0.0
  %813 = vmatprep.subr.mxu0 0.0
  %814 = vmatpush1.xpose.msra.mxu0 0.0
  %815 = vmatprep.subr.mxu0 0.0
  %816 = vmatpush1.xpose.msra.mxu0 0.0
  %817 = vmatprep.subr.mxu0 0.0
  %818 = vmatpush1.xpose.msra.mxu0 0.0
  %819 = vmatprep.subr.mxu0 0.0
  %820 = vmatpush1.xpose.msra.mxu0 0.0
  %821 = vmatprep.subr.mxu0 0.0
  %822 = vmatpush1.xpose.msra.mxu0 0.0
  %823 = vmatprep.subr.mxu0 0.0
  %824 = vmatpush1.xpose.msra.mxu0 0.0
  %825 = vmatprep.subr.mxu0 0.0
  %826 = vmatpush1.xpose.msra.mxu0 %v793
  %827 = vmatprep.subr.mxu0 0.0
  %828 = vmatpush2.xpose.msra.mxu0 0.0
  %829 = vmatprep.subr.mxu0 0.0
  %830 = vmatpush2.xpose.msra.mxu0 0.0
  %831 = vmatprep.subr.mxu0 0.0
  %832 = vmatpush2.xpose.msra.mxu0 0.0
  %833 = vmatprep.subr.mxu0 0.0
  %834 = vmatpush2.xpose.msra.mxu0 0.0
  %835 = vmatprep.subr.mxu0 0.0
  %836 = vmatpush2.xpose.msra.mxu0 0.0
  %837 = vmatprep.subr.mxu0 0.0
  %838 = vmatpush2.xpose.msra.mxu0 0.0
  %839 = vmatprep.subr.mxu0 0.0
  %840 = vmatpush2.xpose.msra.mxu0 0.0
  %841 = vmatprep.subr.mxu0 0.0
  %842 = vmatpush2.xpose.msra.mxu0 0.0
  %843 = vmatprep.subr.mxu0 0.0
  %844 = vmatpush2.xpose.msra.mxu0 0.0
  %845 = vmatprep.subr.mxu0 0.0
  %846 = vmatpush2.xpose.msra.mxu0 0.0
  %847 = vmatprep.subr.mxu0 0.0
  %848 = vmatpush2.xpose.msra.mxu0 0.0
  %849 = vmatprep.subr.mxu0 0.0
  %850 = vmatpush2.xpose.msra.mxu0 0.0
  %851 = vmatprep.subr.mxu0 0.0
  %852 = vmatpush2.xpose.msra.mxu0 0.0
  %853 = vmatprep.subr.mxu0 0.0
  %854 = vmatpush2.xpose.msra.mxu0 0.0
  %855 = vmatprep.subr.mxu0 0.0
  %856 = vmatpush2.xpose.msra.mxu0 0.0
  %857 = vmatprep.subr.mxu0 0.0
  %858 = vmatpush2.xpose.msra.mxu0 0.0
  %859 = vmatprep.mubr.f32.mxu0 0.0
  %860 = vmatmul.mubr.f32.gmra.mxu0 %v791
  %v861 = vpop.f32.mrf.mxu0
  %v862 = vadd.f32 0.0, %v861
  %v863 = vpop.f32.mrf.mxu0
  %864 = vdwg.mxu0
  %v865 = vsel %vm38, %v784, -inf
  %866 = vmax.xlane.f32.xlu0 %v865
  %v867 = vpop.xlane.xlu0 %866
  %v868 = vsel %vm38, %v862, -inf
  %869 = vmax.xlane.f32.xlu0 %v868
  %v870 = vpop.xlane.xlu0 %869
  %v871 = vsub.f32 %v784, %v867
  %v872 = vsub.f32 %v862, %v870
  %v873 = vmul.f32 %v871, 1.442695
  %v874 = vpow.pop %v873
  %v875 = vmul.f32 %v872, 1.442695
  %v876 = vpow.pop %v875
  %v877 = vsel %vm38, %v874, 0.0
  %878 = vadd.xlane.f32.xlu0 %v877
  %v879 = vpop.xlane.xlu0 %878
  %v880 = vsel %vm38, %v876, 0.0
  %881 = vadd.xlane.f32.xlu0 %v880
  %v882 = vpop.xlane.xlu0 %881
  %v883 = vrcp.pop %v879
  %v884 = vmul.f32 %v874, %v883
  %v885 = vrcp.pop %v882
  %v886 = vmul.f32 %v876, %v885
  %887 = vrot.lane.b32.xlu0 %v368, 48
  %v888 = vpop.permute.xlu0 %887
  %v891 = vsel %vm38, %v884, 0
  %893 = vmatprep.subr.mxu0 0.0
  %894 = vmatpush1.msra.mxu0 0.0
  %895 = vmatprep.subr.mxu0 0.0
  %896 = vmatpush1.msra.mxu0 0.0
  %897 = vmatprep.subr.mxu0 0.0
  %898 = vmatpush1.msra.mxu0 0.0
  %899 = vmatprep.subr.mxu0 0.0
  %900 = vmatpush1.msra.mxu0 0.0
  %901 = vmatprep.subr.mxu0 0.0
  %902 = vmatpush1.msra.mxu0 0.0
  %903 = vmatprep.subr.mxu0 0.0
  %904 = vmatpush1.msra.mxu0 0.0
  %905 = vmatprep.subr.mxu0 0.0
  %906 = vmatpush1.msra.mxu0 0.0
  %907 = vmatprep.subr.mxu0 0.0
  %908 = vmatpush1.msra.mxu0 0.0
  %909 = vmatprep.subr.mxu0 0.0
  %910 = vmatpush1.msra.mxu0 0.0
  %911 = vmatprep.subr.mxu0 0.0
  %912 = vmatpush1.msra.mxu0 0.0
  %913 = vmatprep.subr.mxu0 0.0
  %914 = vmatpush1.msra.mxu0 0.0
  %915 = vmatprep.subr.mxu0 0.0
  %916 = vmatpush1.msra.mxu0 0.0
  %917 = vmatprep.subr.mxu0 0.0
  %918 = vmatpush1.msra.mxu0 0.0
  %919 = vmatprep.subr.mxu0 0.0
  %920 = vmatpush1.msra.mxu0 0.0
  %921 = vmatprep.subr.mxu0 0.0
  %922 = vmatpush1.msra.mxu0 0.0
  %923 = vmatprep.subr.mxu0 0.0
  %924 = vmatpush1.msra.mxu0 %v888
  %925 = vmatprep.subr.mxu0 0.0
  %926 = vmatpush2.msra.mxu0 0.0
  %927 = vmatprep.subr.mxu0 0.0
  %928 = vmatpush2.msra.mxu0 0.0
  %929 = vmatprep.subr.mxu0 0.0
  %930 = vmatpush2.msra.mxu0 0.0
  %931 = vmatprep.subr.mxu0 0.0
  %932 = vmatpush2.msra.mxu0 0.0
  %933 = vmatprep.subr.mxu0 0.0
  %934 = vmatpush2.msra.mxu0 0.0
  %935 = vmatprep.subr.mxu0 0.0
  %936 = vmatpush2.msra.mxu0 0.0
  %937 = vmatprep.subr.mxu0 0.0
  %938 = vmatpush2.msra.mxu0 0.0
  %939 = vmatprep.subr.mxu0 0.0
  %940 = vmatpush2.msra.mxu0 0.0
  %941 = vmatprep.subr.mxu0 0.0
  %942 = vmatpush2.msra.mxu0 0.0
  %943 = vmatprep.subr.mxu0 0.0
  %944 = vmatpush2.msra.mxu0 0.0
  %945 = vmatprep.subr.mxu0 0.0
  %946 = vmatpush2.msra.mxu0 0.0
  %947 = vmatprep.subr.mxu0 0.0
  %948 = vmatpush2.msra.mxu0 0.0
  %949 = vmatprep.subr.mxu0 0.0
  %950 = vmatpush2.msra.mxu0 0.0
  %951 = vmatprep.subr.mxu0 0.0
  %952 = vmatpush2.msra.mxu0 0.0
  %953 = vmatprep.subr.mxu0 0.0
  %954 = vmatpush2.msra.mxu0 0.0
  %955 = vmatprep.subr.mxu0 0.0
  %956 = vmatpush2.msra.mxu0 0.0
  %957 = vmatprep.mubr.f32.mxu0 0.0
  %958 = vmatmul.mubr.f32.gmra.mxu0 %v891
  %v959 = vpop.f32.mrf.mxu0
  %v960 = vadd.f32 0.0, %v959
  %v961 = vpop.f32.mrf.mxu0
  %962 = vdwg.mxu0
  %963 = vrot.lane.b32.xlu0 %v373, 48
  %v964 = vpop.permute.xlu0 %963
  %v967 = vsel %vm38, %v886, 0
  %969 = vmatprep.subr.mxu0 0.0
  %970 = vmatpush1.msra.mxu0 0.0
  %971 = vmatprep.subr.mxu0 0.0
  %972 = vmatpush1.msra.mxu0 0.0
  %973 = vmatprep.subr.mxu0 0.0
  %974 = vmatpush1.msra.mxu0 0.0
  %975 = vmatprep.subr.mxu0 0.0
  %976 = vmatpush1.msra.mxu0 0.0
  %977 = vmatprep.subr.mxu0 0.0
  %978 = vmatpush1.msra.mxu0 0.0
  %979 = vmatprep.subr.mxu0 0.0
  %980 = vmatpush1.msra.mxu0 0.0
  %981 = vmatprep.subr.mxu0 0.0
  %982 = vmatpush1.msra.mxu0 0.0
  %983 = vmatprep.subr.mxu0 0.0
  %984 = vmatpush1.msra.mxu0 0.0
  %985 = vmatprep.subr.mxu0 0.0
  %986 = vmatpush1.msra.mxu0 0.0
  %987 = vmatprep.subr.mxu0 0.0
  %988 = vmatpush1.msra.mxu0 0.0
  %989 = vmatprep.subr.mxu0 0.0
  %990 = vmatpush1.msra.mxu0 0.0
  %991 = vmatprep.subr.mxu0 0.0
  %992 = vmatpush1.msra.mxu0 0.0
  %993 = vmatprep.subr.mxu0 0.0
  %994 = vmatpush1.msra.mxu0 0.0
  %995 = vmatprep.subr.mxu0 0.0
  %996 = vmatpush1.msra.mxu0 0.0
  %997 = vmatprep.subr.mxu0 0.0
  %998 = vmatpush1.msra.mxu0 0.0
  %999 = vmatprep.subr.mxu0 0.0
  %1000 = vmatpush1.msra.mxu0 %v964
  %1001 = vmatprep.subr.mxu0 0.0
  %1002 = vmatpush2.msra.mxu0 0.0
  %1003 = vmatprep.subr.mxu0 0.0
  %1004 = vmatpush2.msra.mxu0 0.0
  %1005 = vmatprep.subr.mxu0 0.0
  %1006 = vmatpush2.msra.mxu0 0.0
  %1007 = vmatprep.subr.mxu0 0.0
  %1008 = vmatpush2.msra.mxu0 0.0
  %1009 = vmatprep.subr.mxu0 0.0
  %1010 = vmatpush2.msra.mxu0 0.0
  %1011 = vmatprep.subr.mxu0 0.0
  %1012 = vmatpush2.msra.mxu0 0.0
  %1013 = vmatprep.subr.mxu0 0.0
  %1014 = vmatpush2.msra.mxu0 0.0
  %1015 = vmatprep.subr.mxu0 0.0
  %1016 = vmatpush2.msra.mxu0 0.0
  %1017 = vmatprep.subr.mxu0 0.0
  %1018 = vmatpush2.msra.mxu0 0.0
  %1019 = vmatprep.subr.mxu0 0.0
  %1020 = vmatpush2.msra.mxu0 0.0
  %1021 = vmatprep.subr.mxu0 0.0
  %1022 = vmatpush2.msra.mxu0 0.0
  %1023 = vmatprep.subr.mxu0 0.0
  %1024 = vmatpush2.msra.mxu0 0.0
  %1025 = vmatprep.subr.mxu0 0.0
  %1026 = vmatpush2.msra.mxu0 0.0
  %1027 = vmatprep.subr.mxu0 0.0
  %1028 = vmatpush2.msra.mxu0 0.0
  %1029 = vmatprep.subr.mxu0 0.0
  %1030 = vmatpush2.msra.mxu0 0.0
  %1031 = vmatprep.subr.mxu0 0.0
  %1032 = vmatpush2.msra.mxu0 0.0
  %1033 = vmatprep.mubr.f32.mxu0 0.0
  %1034 = vmatmul.mubr.f32.gmra.mxu0 %v967
  %v1035 = vpop.f32.mrf.mxu0
  %v1036 = vadd.f32 0.0, %v1035
  %v1037 = vpop.f32.mrf.mxu0
  %1038 = vdwg.mxu0
  %1041 = vrot.lane.b32.xlu0 %v960, 16
  %v1042 = vpop.permute.xlu0 %1041
  %1043 = vrot.lane.b32.xlu0 %v1036, 16
  %v1044 = vpop.permute.xlu0 %1043
  %v1047 = vsel %vm381, %v630, %v1042
  %v1048 = vsel %vm381, %v706, %v1044
  %v1049 = vld [vmem:[%s7] sm:$0xff]
  %v1050 = vld [vmem:[%s7 + $0x8] sm:$0xff]
  %v1051 = vld [vmem:[%s7 + $0x10] sm:$0xff]
  %v1052 = vld [vmem:[%s7 + $0x18] sm:$0xff]
  %v1053 = vld [vmem:[%s8] sm:$0x1]
  %v1055 = vlaneseq
  %v1056 = vshrl.u32 %v1055, 7
  %v1057 = vsub.s32 0, %v1056
  %v1058 = vrot.slane %v1053, %v1057
  %v1061 = vsel %vm196, %v1047, 0
  %v1064 = vsel %vm196, %v1048, 0
  %1066 = vmatprep.subr.mxu0 0.0
  %1067 = vmatpush1.msra.mxu0 0.0
  %1068 = vmatprep.subr.mxu0 0.0
  %1069 = vmatpush1.msra.mxu0 0.0
  %1070 = vmatprep.subr.mxu0 0.0
  %1071 = vmatpush1.msra.mxu0 0.0
  %1072 = vmatprep.subr.mxu0 0.0
  %1073 = vmatpush1.msra.mxu0 0.0
  %1074 = vmatprep.subr.mxu0 0.0
  %1075 = vmatpush1.msra.mxu0 0.0
  %1076 = vmatprep.subr.mxu0 0.0
  %1077 = vmatpush1.msra.mxu0 0.0
  %1078 = vmatprep.subr.mxu0 0.0
  %1079 = vmatpush1.msra.mxu0 0.0
  %1080 = vmatprep.subr.mxu0 0.0
  %1081 = vmatpush1.msra.mxu0 0.0
  %1082 = vmatprep.subr.mxu0 0.0
  %1083 = vmatpush1.msra.mxu0 0.0
  %1084 = vmatprep.subr.mxu0 0.0
  %1085 = vmatpush1.msra.mxu0 0.0
  %1086 = vmatprep.subr.mxu0 0.0
  %1087 = vmatpush1.msra.mxu0 0.0
  %1088 = vmatprep.subr.mxu0 0.0
  %1089 = vmatpush1.msra.mxu0 0.0
  %1090 = vmatprep.subr.mxu0 0.0
  %1091 = vmatpush1.msra.mxu0 %v1052
  %1092 = vmatprep.subr.mxu0 0.0
  %1093 = vmatpush1.msra.mxu0 %v1051
  %1094 = vmatprep.subr.mxu0 0.0
  %1095 = vmatpush1.msra.mxu0 %v1050
  %1096 = vmatprep.subr.mxu0 0.0
  %1097 = vmatpush1.msra.mxu0 %v1049
  %1098 = vmatprep.subr.mxu0 0.0
  %1099 = vmatpush2.msra.mxu0 0.0
  %1100 = vmatprep.subr.mxu0 0.0
  %1101 = vmatpush2.msra.mxu0 0.0
  %1102 = vmatprep.subr.mxu0 0.0
  %1103 = vmatpush2.msra.mxu0 0.0
  %1104 = vmatprep.subr.mxu0 0.0
  %1105 = vmatpush2.msra.mxu0 0.0
  %1106 = vmatprep.subr.mxu0 0.0
  %1107 = vmatpush2.msra.mxu0 0.0
  %1108 = vmatprep.subr.mxu0 0.0
  %1109 = vmatpush2.msra.mxu0 0.0
  %1110 = vmatprep.subr.mxu0 0.0
  %1111 = vmatpush2.msra.mxu0 0.0
  %1112 = vmatprep.subr.mxu0 0.0
  %1113 = vmatpush2.msra.mxu0 0.0
  %1114 = vmatprep.subr.mxu0 0.0
  %1115 = vmatpush2.msra.mxu0 0.0
  %1116 = vmatprep.subr.mxu0 0.0
  %1117 = vmatpush2.msra.mxu0 0.0
  %1118 = vmatprep.subr.mxu0 0.0
  %1119 = vmatpush2.msra.mxu0 0.0
  %1120 = vmatprep.subr.mxu0 0.0
  %1121 = vmatpush2.msra.mxu0 0.0
  %1122 = vmatprep.subr.mxu0 0.0
  %1123 = vmatpush2.msra.mxu0 0.0
  %1124 = vmatprep.subr.mxu0 0.0
  %1125 = vmatpush2.msra.mxu0 0.0
  %1126 = vmatprep.subr.mxu0 0.0
  %1127 = vmatpush2.msra.mxu0 0.0
  %1128 = vmatprep.subr.mxu0 0.0
  %1129 = vmatpush2.msra.mxu0 0.0
  %1130 = vmatprep.mubr.f32.mxu0 0.0
  %1131 = vmatmul.mubr.f32.gmra.mxu0 %v1061
  %v1132 = vpop.f32.mrf.mxu0
  %v1133 = vadd.f32 %v1058, %v1132
  %v1134 = vpop.f32.mrf.mxu0
  %1135 = vmatprep.mubr.f32.mxu0 0.0
  %1136 = vmatmul.mubr.f32.gmra.mxu0 %v1064
  %v1137 = vpop.f32.mrf.mxu0
  %v1138 = vadd.f32 %v1058, %v1137
  %v1139 = vpop.f32.mrf.mxu0
  %1140 = vdwg.mxu0
  %v1141 = vsel %vm196, %v1133, 0.0
  %v1142 = vrot.slane %v1141, 4
  %v1143 = vadd.f32 %v1141, %v1142
  %v1144 = vrot.slane %v1143, 2
  %v1145 = vadd.f32 %v1143, %v1144
  %v1146 = vrot.slane %v1145, 1
  %v1147 = vadd.f32 %v1145, %v1146
  %v1148 = vsel %vm196, %v1138, 0.0
  %v1149 = vrot.slane %v1148, 4
  %v1150 = vadd.f32 %v1148, %v1149
  %v1151 = vrot.slane %v1150, 2
  %v1152 = vadd.f32 %v1150, %v1151
  %v1153 = vrot.slane %v1152, 1
  %v1154 = vadd.f32 %v1152, %v1153
  %v1155 = vrcp.pop 8.0
  %v1156 = vmul.f32 %v1147, %v1155
  %v1157 = vmul.f32 %v1154, %v1155
  %vm1160 = vcmask 1041409
  %v1161 = vsel %vm1160, %v1157, %v1156
  %vm1163 = vcmask 254976
  %1164 = vst.msk [vmem:[%s9] sm:$0x3] %vm1163, %v1161
  // Predicated region
  $region38: #{msthn_forward.6} parent=0 // pred_check
    _
  $region39: #{msthn_forward.6} parent=0 // pred_check_branch
    %1166 = sbr.rel (0) target = $region41
  $region40: #{msthn_forward.6} parent=0 // pred_region
    _
  $region41: #{msthn_forward.6} parent=0 // pred_fallthru
    _
  // Predicated region
  $region42: #{msthn_forward.6} parent=0 // pred_check
    _
  $region43: #{msthn_forward.6} parent=0 // pred_check_branch
    %1168 = sbr.rel (0) target = $region45
  $region44: #{msthn_forward.6} parent=0 // pred_region
    _
  $region45: #{msthn_forward.6} parent=0 // pred_fallthru
    _

// kernel: msthn_forward.10
$region0: #{msthn_forward.10}
  #allocation0 [shape = 'u32[]', space=smem, size = 0x4, offset = 0x4, fixed_abs, tag = 'smem constant byte address 0x4 - core index']
  #allocation1 [shape = 'u32[144,128]{1,0:T(1,128)}', space=vmem, size = 0x12000, scoped, tag = 'internal scratch']
  %s0 = inlined_call_operand.vmem [shape: f32[8,8], index: 0, kind: input, shape index: {}]
  %s1 = inlined_call_operand.vmem [shape: f32[8,32], index: 1, kind: input, shape index: {}]
  %s2 = inlined_call_operand.vmem [shape: f32[8,32], index: 2, kind: output, shape index: {}]
  %s3 = sld [smem:[#allocation0]]
  $region18: #{msthn_forward.10} parent=0
    _
  %s5 = ssub.s32 1, %s3
  %s6 = scalar_select 0, %s5, %s3
  // Predicated region
  $region2: #{msthn_forward.10} parent=0 // pred_check
    _
  $region3: #{msthn_forward.10} parent=0 // pred_check_branch
    %8 = sbr.rel (0) target = $region5
  $region4: #{msthn_forward.10} parent=0 // pred_region
    _
  $region5: #{msthn_forward.10} parent=0 // pred_fallthru
    _
  // Predicated region
  $region6: #{msthn_forward.10} parent=0 // pred_check
    _
  $region7: #{msthn_forward.10} parent=0 // pred_check_branch
    %10 = sbr.rel (0) target = $region9
  $region8: #{msthn_forward.10} parent=0 // pred_region
    _
  $region9: #{msthn_forward.10} parent=0 // pred_fallthru
    _
  %v11 = vld [vmem:[%s0] sm:$0xff]
  %v12 = vld [vmem:[%s1] sm:$0xff]
  %vm13 = vcmask 64512
  %v15 = vsel %vm13, %v11, 0
  %17 = vmatprep.subr.mxu0 0.0
  %18 = vmatpush1.msra.mxu0 0.0
  %19 = vmatprep.subr.mxu0 0.0
  %20 = vmatpush1.msra.mxu0 0.0
  %21 = vmatprep.subr.mxu0 0.0
  %22 = vmatpush1.msra.mxu0 0.0
  %23 = vmatprep.subr.mxu0 0.0
  %24 = vmatpush1.msra.mxu0 0.0
  %25 = vmatprep.subr.mxu0 0.0
  %26 = vmatpush1.msra.mxu0 0.0
  %27 = vmatprep.subr.mxu0 0.0
  %28 = vmatpush1.msra.mxu0 0.0
  %29 = vmatprep.subr.mxu0 0.0
  %30 = vmatpush1.msra.mxu0 0.0
  %31 = vmatprep.subr.mxu0 0.0
  %32 = vmatpush1.msra.mxu0 0.0
  %33 = vmatprep.subr.mxu0 0.0
  %34 = vmatpush1.msra.mxu0 0.0
  %35 = vmatprep.subr.mxu0 0.0
  %36 = vmatpush1.msra.mxu0 0.0
  %37 = vmatprep.subr.mxu0 0.0
  %38 = vmatpush1.msra.mxu0 0.0
  %39 = vmatprep.subr.mxu0 0.0
  %40 = vmatpush1.msra.mxu0 0.0
  %41 = vmatprep.subr.mxu0 0.0
  %42 = vmatpush1.msra.mxu0 0.0
  %43 = vmatprep.subr.mxu0 0.0
  %44 = vmatpush1.msra.mxu0 0.0
  %45 = vmatprep.subr.mxu0 0.0
  %46 = vmatpush1.msra.mxu0 0.0
  %47 = vmatprep.subr.mxu0 0.0
  %48 = vmatpush1.msra.mxu0 %v12
  %49 = vmatprep.subr.mxu0 0.0
  %50 = vmatpush2.msra.mxu0 0.0
  %51 = vmatprep.subr.mxu0 0.0
  %52 = vmatpush2.msra.mxu0 0.0
  %53 = vmatprep.subr.mxu0 0.0
  %54 = vmatpush2.msra.mxu0 0.0
  %55 = vmatprep.subr.mxu0 0.0
  %56 = vmatpush2.msra.mxu0 0.0
  %57 = vmatprep.subr.mxu0 0.0
  %58 = vmatpush2.msra.mxu0 0.0
  %59 = vmatprep.subr.mxu0 0.0
  %60 = vmatpush2.msra.mxu0 0.0
  %61 = vmatprep.subr.mxu0 0.0
  %62 = vmatpush2.msra.mxu0 0.0
  %63 = vmatprep.subr.mxu0 0.0
  %64 = vmatpush2.msra.mxu0 0.0
  %65 = vmatprep.subr.mxu0 0.0
  %66 = vmatpush2.msra.mxu0 0.0
  %67 = vmatprep.subr.mxu0 0.0
  %68 = vmatpush2.msra.mxu0 0.0
  %69 = vmatprep.subr.mxu0 0.0
  %70 = vmatpush2.msra.mxu0 0.0
  %71 = vmatprep.subr.mxu0 0.0
  %72 = vmatpush2.msra.mxu0 0.0
  %73 = vmatprep.subr.mxu0 0.0
  %74 = vmatpush2.msra.mxu0 0.0
  %75 = vmatprep.subr.mxu0 0.0
  %76 = vmatpush2.msra.mxu0 0.0
  %77 = vmatprep.subr.mxu0 0.0
  %78 = vmatpush2.msra.mxu0 0.0
  %79 = vmatprep.subr.mxu0 0.0
  %80 = vmatpush2.msra.mxu0 0.0
  %81 = vmatprep.mubr.f32.mxu0 0.0
  %82 = vmatmul.mubr.f32.gmra.mxu0 %v15
  %v83 = vpop.f32.mrf.mxu0
  %v84 = vadd.f32 0.0, %v83
  %v85 = vpop.f32.mrf.mxu0
  %86 = vdwg.mxu0
  %v87 = vadd.f32 %v12, %v84
  %88 = vmatprep.subr.mxu0 0.0
  %89 = vmatpush1.msra.mxu0 0.0
  %90 = vmatprep.subr.mxu0 0.0
  %91 = vmatpush1.msra.mxu0 0.0
  %92 = vmatprep.subr.mxu0 0.0
  %93 = vmatpush1.msra.mxu0 0.0
  %94 = vmatprep.subr.mxu0 0.0
  %95 = vmatpush1.msra.mxu0 0.0
  %96 = vmatprep.subr.mxu0 0.0
  %97 = vmatpush1.msra.mxu0 0.0
  %98 = vmatprep.subr.mxu0 0.0
  %99 = vmatpush1.msra.mxu0 0.0
  %100 = vmatprep.subr.mxu0 0.0
  %101 = vmatpush1.msra.mxu0 0.0
  %102 = vmatprep.subr.mxu0 0.0
  %103 = vmatpush1.msra.mxu0 0.0
  %104 = vmatprep.subr.mxu0 0.0
  %105 = vmatpush1.msra.mxu0 0.0
  %106 = vmatprep.subr.mxu0 0.0
  %107 = vmatpush1.msra.mxu0 0.0
  %108 = vmatprep.subr.mxu0 0.0
  %109 = vmatpush1.msra.mxu0 0.0
  %110 = vmatprep.subr.mxu0 0.0
  %111 = vmatpush1.msra.mxu0 0.0
  %112 = vmatprep.subr.mxu0 0.0
  %113 = vmatpush1.msra.mxu0 0.0
  %114 = vmatprep.subr.mxu0 0.0
  %115 = vmatpush1.msra.mxu0 0.0
  %116 = vmatprep.subr.mxu0 0.0
  %117 = vmatpush1.msra.mxu0 0.0
  %118 = vmatprep.subr.mxu0 0.0
  %119 = vmatpush1.msra.mxu0 %v84
  %120 = vmatprep.subr.mxu0 0.0
  %121 = vmatpush2.msra.mxu0 0.0
  %122 = vmatprep.subr.mxu0 0.0
  %123 = vmatpush2.msra.mxu0 0.0
  %124 = vmatprep.subr.mxu0 0.0
  %125 = vmatpush2.msra.mxu0 0.0
  %126 = vmatprep.subr.mxu0 0.0
  %127 = vmatpush2.msra.mxu0 0.0
  %128 = vmatprep.subr.mxu0 0.0
  %129 = vmatpush2.msra.mxu0 0.0
  %130 = vmatprep.subr.mxu0 0.0
  %131 = vmatpush2.msra.mxu0 0.0
  %132 = vmatprep.subr.mxu0 0.0
  %133 = vmatpush2.msra.mxu0 0.0
  %134 = vmatprep.subr.mxu0 0.0
  %135 = vmatpush2.msra.mxu0 0.0
  %136 = vmatprep.subr.mxu0 0.0
  %137 = vmatpush2.msra.mxu0 0.0
  %138 = vmatprep.subr.mxu0 0.0
  %139 = vmatpush2.msra.mxu0 0.0
  %140 = vmatprep.subr.mxu0 0.0
  %141 = vmatpush2.msra.mxu0 0.0
  %142 = vmatprep.subr.mxu0 0.0
  %143 = vmatpush2.msra.mxu0 0.0
  %144 = vmatprep.subr.mxu0 0.0
  %145 = vmatpush2.msra.mxu0 0.0
  %146 = vmatprep.subr.mxu0 0.0
  %147 = vmatpush2.msra.mxu0 0.0
  %148 = vmatprep.subr.mxu0 0.0
  %149 = vmatpush2.msra.mxu0 0.0
  %150 = vmatprep.subr.mxu0 0.0
  %151 = vmatpush2.msra.mxu0 0.0
  %152 = vmatprep.mubr.f32.mxu0 0.0
  %153 = vmatmul.mubr.f32.gmra.mxu0 %v15
  %v154 = vpop.f32.mrf.mxu0
  %v155 = vadd.f32 0.0, %v154
  %v156 = vpop.f32.mrf.mxu0
  %157 = vdwg.mxu0
  %v158 = vadd.f32 %v87, %v155
  %v159 = vmul.f32 %v158, 0.33333334
  %vm160 = vcmask 261120
  %161 = vst.msk [vmem:[%s2] sm:$0xff] %vm160, %v159
  // Predicated region
  $region10: #{msthn_forward.10} parent=0 // pred_check
    _
  $region11: #{msthn_forward.10} parent=0 // pred_check_branch
    %163 = sbr.rel (0) target = $region13
  $region12: #{msthn_forward.10} parent=0 // pred_region
    _
  $region13: #{msthn_forward.10} parent=0 // pred_fallthru
    _
  // Predicated region
  $region14: #{msthn_forward.10} parent=0 // pred_check
    _
  $region15: #{msthn_forward.10} parent=0 // pred_check_branch
    %165 = sbr.rel (0) target = $region17
  $region16: #{msthn_forward.10} parent=0 // pred_region
    _
  $region17: #{msthn_forward.10} parent=0 // pred_fallthru
    _

// kernel: msthn_forward.11
$region0: #{msthn_forward.11}
  #allocation0 [shape = 'u32[]', space=smem, size = 0x4, offset = 0x4, fixed_abs, tag = 'smem constant byte address 0x4 - core index']
  #allocation1 [shape = 'u32[144,128]{1,0:T(1,128)}', space=vmem, size = 0x12000, scoped, tag = 'internal scratch']
  %s0 = inlined_call_operand.vmem [shape: f32[2,8,32], index: 0, kind: input, shape index: {}]
  %s1 = inlined_call_operand.vmem [shape: f32[2,8,32], index: 1, kind: input, shape index: {}]
  %s2 = inlined_call_operand.vmem [shape: f32[2,1], index: 2, kind: input, shape index: {}]
  %s3 = inlined_call_operand.vmem [shape: f32[32,32], index: 3, kind: input, shape index: {}]
  %s4 = inlined_call_operand.vmem [shape: f32[32,32], index: 4, kind: input, shape index: {}]
  %s5 = inlined_call_operand.vmem [shape: f32[1,32], index: 5, kind: input, shape index: {}]
  %s6 = inlined_call_operand.vmem [shape: f32[32,32], index: 6, kind: input, shape index: {}]
  %s7 = inlined_call_operand.vmem [shape: f32[1,32], index: 7, kind: input, shape index: {}]
  %s8 = inlined_call_operand.vmem [shape: f32[32,32], index: 8, kind: input, shape index: {}]
  %s9 = inlined_call_operand.vmem [shape: f32[1,32], index: 9, kind: input, shape index: {}]
  %s10 = inlined_call_operand.vmem [shape: f32[2,32], index: 10, kind: output, shape index: {}]
  %s11 = sld [smem:[#allocation0]]
  $region50: #{msthn_forward.11} parent=0
    _
  %s13 = ssub.s32 1, %s11
  %s14 = scalar_select 0, %s13, %s11
  // Predicated region
  $region2: #{msthn_forward.11} parent=0 // pred_check
    _
  $region3: #{msthn_forward.11} parent=0 // pred_check_branch
    %16 = sbr.rel (0) target = $region5
  $region4: #{msthn_forward.11} parent=0 // pred_region
    _
  $region5: #{msthn_forward.11} parent=0 // pred_fallthru
    _
  // Predicated region
  $region6: #{msthn_forward.11} parent=0 // pred_check
    _
  $region7: #{msthn_forward.11} parent=0 // pred_check_branch
    %18 = sbr.rel (0) target = $region9
  $region8: #{msthn_forward.11} parent=0 // pred_region
    _
  $region9: #{msthn_forward.11} parent=0 // pred_fallthru
    _
  // Predicated region
  $region10: #{msthn_forward.11} parent=0 // pred_check
    _
  $region11: #{msthn_forward.11} parent=0 // pred_check_branch
    %20 = sbr.rel (0) target = $region13
  $region12: #{msthn_forward.11} parent=0 // pred_region
    _
  $region13: #{msthn_forward.11} parent=0 // pred_fallthru
    _
  // Predicated region
  $region14: #{msthn_forward.11} parent=0 // pred_check
    _
  $region15: #{msthn_forward.11} parent=0 // pred_check_branch
    %22 = sbr.rel (0) target = $region17
  $region16: #{msthn_forward.11} parent=0 // pred_region
    _
  $region17: #{msthn_forward.11} parent=0 // pred_fallthru
    _
  // Predicated region
  $region18: #{msthn_forward.11} parent=0 // pred_check
    _
  $region19: #{msthn_forward.11} parent=0 // pred_check_branch
    %24 = sbr.rel (0) target = $region21
  $region20: #{msthn_forward.11} parent=0 // pred_region
    _
  $region21: #{msthn_forward.11} parent=0 // pred_fallthru
    _
  // Predicated region
  $region22: #{msthn_forward.11} parent=0 // pred_check
    _
  $region23: #{msthn_forward.11} parent=0 // pred_check_branch
    %26 = sbr.rel (0) target = $region25
  $region24: #{msthn_forward.11} parent=0 // pred_region
    _
  $region25: #{msthn_forward.11} parent=0 // pred_fallthru
    _
  // Predicated region
  $region26: #{msthn_forward.11} parent=0 // pred_check
    _
  $region27: #{msthn_forward.11} parent=0 // pred_check_branch
    %28 = sbr.rel (0) target = $region29
  $region28: #{msthn_forward.11} parent=0 // pred_region
    _
  $region29: #{msthn_forward.11} parent=0 // pred_fallthru
    _
  // Predicated region
  $region30: #{msthn_forward.11} parent=0 // pred_check
    _
  $region31: #{msthn_forward.11} parent=0 // pred_check_branch
    %30 = sbr.rel (0) target = $region33
  $region32: #{msthn_forward.11} parent=0 // pred_region
    _
  $region33: #{msthn_forward.11} parent=0 // pred_fallthru
    _
  // Predicated region
  $region34: #{msthn_forward.11} parent=0 // pred_check
    _
  $region35: #{msthn_forward.11} parent=0 // pred_check_branch
    %32 = sbr.rel (0) target = $region37
  $region36: #{msthn_forward.11} parent=0 // pred_region
    _
  $region37: #{msthn_forward.11} parent=0 // pred_fallthru
    _
  // Predicated region
  $region38: #{msthn_forward.11} parent=0 // pred_check
    _
  $region39: #{msthn_forward.11} parent=0 // pred_check_branch
    %34 = sbr.rel (0) target = $region41
  $region40: #{msthn_forward.11} parent=0 // pred_region
    _
  $region41: #{msthn_forward.11} parent=0 // pred_fallthru
    _
  %v35 = vld [vmem:[%s0] sm:$0xff]
  %v36 = vld [vmem:[%s0 + $0x8] sm:$0xff]
  %v37 = vld [vmem:[%s1] sm:$0xff]
  %v38 = vld [vmem:[%s1 + $0x8] sm:$0xff]
  %v39 = vld [vmem:[%s2] sm:$0x3]
  %vm40 = vcmask 261120
  %v41 = vsel %vm40, %v35, 0.0
  %v42 = vrot.slane %v41, 4
  %v43 = vadd.f32 %v41, %v42
  %v44 = vrot.slane %v43, 2
  %v45 = vadd.f32 %v43, %v44
  %v46 = vrot.slane %v45, 1
  %v47 = vadd.f32 %v45, %v46
  %v48 = vsel %vm40, %v36, 0.0
  %v49 = vrot.slane %v48, 4
  %v50 = vadd.f32 %v48, %v49
  %v51 = vrot.slane %v50, 2
  %v52 = vadd.f32 %v50, %v51
  %v53 = vrot.slane %v52, 1
  %v54 = vadd.f32 %v52, %v53
  %56 = vset.pattern.permute.xlu0 0
  %57 = vperm.xlu0 %56, %v39
  %v58 = vpop.permute.xlu0 %57
  %v59 = vrot.slane %v58, 1
  %v62 = vrcp.pop %v58
  %v63 = vmul.f32 %v47, %v62
  %v64 = vrcp.pop %v59
  %v65 = vmul.f32 %v54, %v64
  %v66 = vld [vmem:[%s8] sm:$0xff]
  %v67 = vld [vmem:[%s8 + $0x8] sm:$0xff]
  %v68 = vld [vmem:[%s8 + $0x10] sm:$0xff]
  %v69 = vld [vmem:[%s8 + $0x18] sm:$0xff]
  %v72 = vrot.slane %v65, 7
  %vm73 = vcmask 1041409
  %v74 = vsel %vm73, %v72, %v63
  %v75 = vsel %vm40, %v74, 0
  %77 = vmatprep.subr.mxu0 0.0
  %78 = vmatpush1.msra.mxu0 0.0
  %79 = vmatprep.subr.mxu0 0.0
  %80 = vmatpush1.msra.mxu0 0.0
  %81 = vmatprep.subr.mxu0 0.0
  %82 = vmatpush1.msra.mxu0 0.0
  %83 = vmatprep.subr.mxu0 0.0
  %84 = vmatpush1.msra.mxu0 0.0
  %85 = vmatprep.subr.mxu0 0.0
  %86 = vmatpush1.msra.mxu0 0.0
  %87 = vmatprep.subr.mxu0 0.0
  %88 = vmatpush1.msra.mxu0 0.0
  %89 = vmatprep.subr.mxu0 0.0
  %90 = vmatpush1.msra.mxu0 0.0
  %91 = vmatprep.subr.mxu0 0.0
  %92 = vmatpush1.msra.mxu0 0.0
  %93 = vmatprep.subr.mxu0 0.0
  %94 = vmatpush1.msra.mxu0 0.0
  %95 = vmatprep.subr.mxu0 0.0
  %96 = vmatpush1.msra.mxu0 0.0
  %97 = vmatprep.subr.mxu0 0.0
  %98 = vmatpush1.msra.mxu0 0.0
  %99 = vmatprep.subr.mxu0 0.0
  %100 = vmatpush1.msra.mxu0 0.0
  %101 = vmatprep.subr.mxu0 0.0
  %102 = vmatpush1.msra.mxu0 %v69
  %103 = vmatprep.subr.mxu0 0.0
  %104 = vmatpush1.msra.mxu0 %v68
  %105 = vmatprep.subr.mxu0 0.0
  %106 = vmatpush1.msra.mxu0 %v67
  %107 = vmatprep.subr.mxu0 0.0
  %108 = vmatpush1.msra.mxu0 %v66
  %109 = vmatprep.subr.mxu0 0.0
  %110 = vmatpush2.msra.mxu0 0.0
  %111 = vmatprep.subr.mxu0 0.0
  %112 = vmatpush2.msra.mxu0 0.0
  %113 = vmatprep.subr.mxu0 0.0
  %114 = vmatpush2.msra.mxu0 0.0
  %115 = vmatprep.subr.mxu0 0.0
  %116 = vmatpush2.msra.mxu0 0.0
  %117 = vmatprep.subr.mxu0 0.0
  %118 = vmatpush2.msra.mxu0 0.0
  %119 = vmatprep.subr.mxu0 0.0
  %120 = vmatpush2.msra.mxu0 0.0
  %121 = vmatprep.subr.mxu0 0.0
  %122 = vmatpush2.msra.mxu0 0.0
  %123 = vmatprep.subr.mxu0 0.0
  %124 = vmatpush2.msra.mxu0 0.0
  %125 = vmatprep.subr.mxu0 0.0
  %126 = vmatpush2.msra.mxu0 0.0
  %127 = vmatprep.subr.mxu0 0.0
  %128 = vmatpush2.msra.mxu0 0.0
  %129 = vmatprep.subr.mxu0 0.0
  %130 = vmatpush2.msra.mxu0 0.0
  %131 = vmatprep.subr.mxu0 0.0
  %132 = vmatpush2.msra.mxu0 0.0
  %133 = vmatprep.subr.mxu0 0.0
  %134 = vmatpush2.msra.mxu0 0.0
  %135 = vmatprep.subr.mxu0 0.0
  %136 = vmatpush2.msra.mxu0 0.0
  %137 = vmatprep.subr.mxu0 0.0
  %138 = vmatpush2.msra.mxu0 0.0
  %139 = vmatprep.subr.mxu0 0.0
  %140 = vmatpush2.msra.mxu0 0.0
  %141 = vmatprep.mubr.f32.mxu0 0.0
  %142 = vmatmul.mubr.f32.gmra.mxu0 %v75
  %v143 = vpop.f32.mrf.mxu0
  %v144 = vadd.f32 0.0, %v143
  %v145 = vpop.f32.mrf.mxu0
  %146 = vdwg.mxu0
  %v147 = vld [vmem:[%s3] sm:$0xff]
  %v148 = vld [vmem:[%s3 + $0x8] sm:$0xff]
  %v149 = vld [vmem:[%s3 + $0x10] sm:$0xff]
  %v150 = vld [vmem:[%s3 + $0x18] sm:$0xff]
  %v151 = vld [vmem:[%s4] sm:$0xff]
  %v152 = vld [vmem:[%s4 + $0x8] sm:$0xff]
  %v153 = vld [vmem:[%s4 + $0x10] sm:$0xff]
  %v154 = vld [vmem:[%s4 + $0x18] sm:$0xff]
  %v156 = vsel %vm40, %v35, 0
  %v159 = vsel %vm40, %v36, 0
  %161 = vmatprep.subr.mxu0 0.0
  %162 = vmatpush1.msra.mxu0 0.0
  %163 = vmatprep.subr.mxu0 0.0
  %164 = vmatpush1.msra.mxu0 0.0
  %165 = vmatprep.subr.mxu0 0.0
  %166 = vmatpush1.msra.mxu0 0.0
  %167 = vmatprep.subr.mxu0 0.0
  %168 = vmatpush1.msra.mxu0 0.0
  %169 = vmatprep.subr.mxu0 0.0
  %170 = vmatpush1.msra.mxu0 0.0
  %171 = vmatprep.subr.mxu0 0.0
  %172 = vmatpush1.msra.mxu0 0.0
  %173 = vmatprep.subr.mxu0 0.0
  %174 = vmatpush1.msra.mxu0 0.0
  %175 = vmatprep.subr.mxu0 0.0
  %176 = vmatpush1.msra.mxu0 0.0
  %177 = vmatprep.subr.mxu0 0.0
  %178 = vmatpush1.msra.mxu0 0.0
  %179 = vmatprep.subr.mxu0 0.0
  %180 = vmatpush1.msra.mxu0 0.0
  %181 = vmatprep.subr.mxu0 0.0
  %182 = vmatpush1.msra.mxu0 0.0
  %183 = vmatprep.subr.mxu0 0.0
  %184 = vmatpush1.msra.mxu0 0.0
  %185 = vmatprep.subr.mxu0 0.0
  %186 = vmatpush1.msra.mxu0 %v154
  %187 = vmatprep.subr.mxu0 0.0
  %188 = vmatpush1.msra.mxu0 %v153
  %189 = vmatprep.subr.mxu0 0.0
  %190 = vmatpush1.msra.mxu0 %v152
  %191 = vmatprep.subr.mxu0 0.0
  %192 = vmatpush1.msra.mxu0 %v151
  %193 = vmatprep.subr.mxu0 0.0
  %194 = vmatpush2.msra.mxu0 0.0
  %195 = vmatprep.subr.mxu0 0.0
  %196 = vmatpush2.msra.mxu0 0.0
  %197 = vmatprep.subr.mxu0 0.0
  %198 = vmatpush2.msra.mxu0 0.0
  %199 = vmatprep.subr.mxu0 0.0
  %200 = vmatpush2.msra.mxu0 0.0
  %201 = vmatprep.subr.mxu0 0.0
  %202 = vmatpush2.msra.mxu0 0.0
  %203 = vmatprep.subr.mxu0 0.0
  %204 = vmatpush2.msra.mxu0 0.0
  %205 = vmatprep.subr.mxu0 0.0
  %206 = vmatpush2.msra.mxu0 0.0
  %207 = vmatprep.subr.mxu0 0.0
  %208 = vmatpush2.msra.mxu0 0.0
  %209 = vmatprep.subr.mxu0 0.0
  %210 = vmatpush2.msra.mxu0 0.0
  %211 = vmatprep.subr.mxu0 0.0
  %212 = vmatpush2.msra.mxu0 0.0
  %213 = vmatprep.subr.mxu0 0.0
  %214 = vmatpush2.msra.mxu0 0.0
  %215 = vmatprep.subr.mxu0 0.0
  %216 = vmatpush2.msra.mxu0 0.0
  %217 = vmatprep.subr.mxu0 0.0
  %218 = vmatpush2.msra.mxu0 0.0
  %219 = vmatprep.subr.mxu0 0.0
  %220 = vmatpush2.msra.mxu0 0.0
  %221 = vmatprep.subr.mxu0 0.0
  %222 = vmatpush2.msra.mxu0 0.0
  %223 = vmatprep.subr.mxu0 0.0
  %224 = vmatpush2.msra.mxu0 0.0
  %225 = vmatprep.mubr.f32.mxu0 0.0
  %226 = vmatmul.mubr.f32.gmra.mxu0 %v156
  %v227 = vpop.f32.mrf.mxu0
  %v228 = vadd.f32 0.0, %v227
  %v229 = vpop.f32.mrf.mxu0
  %230 = vmatprep.mubr.f32.mxu0 0.0
  %231 = vmatmul.mubr.f32.gmra.mxu0 %v159
  %v232 = vpop.f32.mrf.mxu0
  %v233 = vadd.f32 0.0, %v232
  %v234 = vpop.f32.mrf.mxu0
  %235 = vdwg.mxu0
  %v237 = vsel %vm40, %v37, 0
  %v240 = vsel %vm40, %v38, 0
  %242 = vmatprep.subr.mxu0 0.0
  %243 = vmatpush1.msra.mxu0 0.0
  %244 = vmatprep.subr.mxu0 0.0
  %245 = vmatpush1.msra.mxu0 0.0
  %246 = vmatprep.subr.mxu0 0.0
  %247 = vmatpush1.msra.mxu0 0.0
  %248 = vmatprep.subr.mxu0 0.0
  %249 = vmatpush1.msra.mxu0 0.0
  %250 = vmatprep.subr.mxu0 0.0
  %251 = vmatpush1.msra.mxu0 0.0
  %252 = vmatprep.subr.mxu0 0.0
  %253 = vmatpush1.msra.mxu0 0.0
  %254 = vmatprep.subr.mxu0 0.0
  %255 = vmatpush1.msra.mxu0 0.0
  %256 = vmatprep.subr.mxu0 0.0
  %257 = vmatpush1.msra.mxu0 0.0
  %258 = vmatprep.subr.mxu0 0.0
  %259 = vmatpush1.msra.mxu0 0.0
  %260 = vmatprep.subr.mxu0 0.0
  %261 = vmatpush1.msra.mxu0 0.0
  %262 = vmatprep.subr.mxu0 0.0
  %263 = vmatpush1.msra.mxu0 0.0
  %264 = vmatprep.subr.mxu0 0.0
  %265 = vmatpush1.msra.mxu0 0.0
  %266 = vmatprep.subr.mxu0 0.0
  %267 = vmatpush1.msra.mxu0 %v150
  %268 = vmatprep.subr.mxu0 0.0
  %269 = vmatpush1.msra.mxu0 %v149
  %270 = vmatprep.subr.mxu0 0.0
  %271 = vmatpush1.msra.mxu0 %v148
  %272 = vmatprep.subr.mxu0 0.0
  %273 = vmatpush1.msra.mxu0 %v147
  %274 = vmatprep.subr.mxu0 0.0
  %275 = vmatpush2.msra.mxu0 0.0
  %276 = vmatprep.subr.mxu0 0.0
  %277 = vmatpush2.msra.mxu0 0.0
  %278 = vmatprep.subr.mxu0 0.0
  %279 = vmatpush2.msra.mxu0 0.0
  %280 = vmatprep.subr.mxu0 0.0
  %281 = vmatpush2.msra.mxu0 0.0
  %282 = vmatprep.subr.mxu0 0.0
  %283 = vmatpush2.msra.mxu0 0.0
  %284 = vmatprep.subr.mxu0 0.0
  %285 = vmatpush2.msra.mxu0 0.0
  %286 = vmatprep.subr.mxu0 0.0
  %287 = vmatpush2.msra.mxu0 0.0
  %288 = vmatprep.subr.mxu0 0.0
  %289 = vmatpush2.msra.mxu0 0.0
  %290 = vmatprep.subr.mxu0 0.0
  %291 = vmatpush2.msra.mxu0 0.0
  %292 = vmatprep.subr.mxu0 0.0
  %293 = vmatpush2.msra.mxu0 0.0
  %294 = vmatprep.subr.mxu0 0.0
  %295 = vmatpush2.msra.mxu0 0.0
  %296 = vmatprep.subr.mxu0 0.0
  %297 = vmatpush2.msra.mxu0 0.0
  %298 = vmatprep.subr.mxu0 0.0
  %299 = vmatpush2.msra.mxu0 0.0
  %300 = vmatprep.subr.mxu0 0.0
  %301 = vmatpush2.msra.mxu0 0.0
  %302 = vmatprep.subr.mxu0 0.0
  %303 = vmatpush2.msra.mxu0 0.0
  %304 = vmatprep.subr.mxu0 0.0
  %305 = vmatpush2.msra.mxu0 0.0
  %306 = vmatprep.mubr.f32.mxu0 0.0
  %307 = vmatmul.mubr.f32.gmra.mxu0 %v237
  %v308 = vpop.f32.mrf.mxu0
  %v309 = vadd.f32 %v228, %v308
  %v310 = vpop.f32.mrf.mxu0
  %311 = vmatprep.mubr.f32.mxu0 0.0
  %312 = vmatmul.mubr.f32.gmra.mxu0 %v240
  %v313 = vpop.f32.mrf.mxu0
  %v314 = vadd.f32 %v233, %v313
  %v315 = vpop.f32.mrf.mxu0
  %316 = vdwg.mxu0
  %v317 = vld [vmem:[%s5] sm:$0x1]
  %v319 = vlaneseq
  %v320 = vshrl.u32 %v319, 7
  %v321 = vsub.s32 0, %v320
  %v322 = vrot.slane %v317, %v321
  %v324 = vadd.f32 %v309, %v322
  %v325 = vadd.f32 %v314, %v322
  %v326 = vtanh.pop %v324
  %v327 = vtanh.pop %v325
  %v328 = vld [vmem:[%s6] sm:$0xff]
  %v329 = vld [vmem:[%s6 + $0x8] sm:$0xff]
  %v330 = vld [vmem:[%s6 + $0x10] sm:$0xff]
  %v331 = vld [vmem:[%s6 + $0x18] sm:$0xff]
  %v332 = vld [vmem:[%s7] sm:$0x1]
  %v334 = vlaneseq
  %v335 = vshrl.u32 %v334, 7
  %v336 = vsub.s32 0, %v335
  %v337 = vrot.slane %v332, %v336
  %v340 = vsel %vm40, %v326, 0
  %v343 = vsel %vm40, %v327, 0
  %345 = vmatprep.subr.mxu0 0.0
  %346 = vmatpush1.msra.mxu0 0.0
  %347 = vmatprep.subr.mxu0 0.0
  %348 = vmatpush1.msra.mxu0 0.0
  %349 = vmatprep.subr.mxu0 0.0
  %350 = vmatpush1.msra.mxu0 0.0
  %351 = vmatprep.subr.mxu0 0.0
  %352 = vmatpush1.msra.mxu0 0.0
  %353 = vmatprep.subr.mxu0 0.0
  %354 = vmatpush1.msra.mxu0 0.0
  %355 = vmatprep.subr.mxu0 0.0
  %356 = vmatpush1.msra.mxu0 0.0
  %357 = vmatprep.subr.mxu0 0.0
  %358 = vmatpush1.msra.mxu0 0.0
  %359 = vmatprep.subr.mxu0 0.0
  %360 = vmatpush1.msra.mxu0 0.0
  %361 = vmatprep.subr.mxu0 0.0
  %362 = vmatpush1.msra.mxu0 0.0
  %363 = vmatprep.subr.mxu0 0.0
  %364 = vmatpush1.msra.mxu0 0.0
  %365 = vmatprep.subr.mxu0 0.0
  %366 = vmatpush1.msra.mxu0 0.0
  %367 = vmatprep.subr.mxu0 0.0
  %368 = vmatpush1.msra.mxu0 0.0
  %369 = vmatprep.subr.mxu0 0.0
  %370 = vmatpush1.msra.mxu0 %v331
  %371 = vmatprep.subr.mxu0 0.0
  %372 = vmatpush1.msra.mxu0 %v330
  %373 = vmatprep.subr.mxu0 0.0
  %374 = vmatpush1.msra.mxu0 %v329
  %375 = vmatprep.subr.mxu0 0.0
  %376 = vmatpush1.msra.mxu0 %v328
  %377 = vmatprep.subr.mxu0 0.0
  %378 = vmatpush2.msra.mxu0 0.0
  %379 = vmatprep.subr.mxu0 0.0
  %380 = vmatpush2.msra.mxu0 0.0
  %381 = vmatprep.subr.mxu0 0.0
  %382 = vmatpush2.msra.mxu0 0.0
  %383 = vmatprep.subr.mxu0 0.0
  %384 = vmatpush2.msra.mxu0 0.0
  %385 = vmatprep.subr.mxu0 0.0
  %386 = vmatpush2.msra.mxu0 0.0
  %387 = vmatprep.subr.mxu0 0.0
  %388 = vmatpush2.msra.mxu0 0.0
  %389 = vmatprep.subr.mxu0 0.0
  %390 = vmatpush2.msra.mxu0 0.0
  %391 = vmatprep.subr.mxu0 0.0
  %392 = vmatpush2.msra.mxu0 0.0
  %393 = vmatprep.subr.mxu0 0.0
  %394 = vmatpush2.msra.mxu0 0.0
  %395 = vmatprep.subr.mxu0 0.0
  %396 = vmatpush2.msra.mxu0 0.0
  %397 = vmatprep.subr.mxu0 0.0
  %398 = vmatpush2.msra.mxu0 0.0
  %399 = vmatprep.subr.mxu0 0.0
  %400 = vmatpush2.msra.mxu0 0.0
  %401 = vmatprep.subr.mxu0 0.0
  %402 = vmatpush2.msra.mxu0 0.0
  %403 = vmatprep.subr.mxu0 0.0
  %404 = vmatpush2.msra.mxu0 0.0
  %405 = vmatprep.subr.mxu0 0.0
  %406 = vmatpush2.msra.mxu0 0.0
  %407 = vmatprep.subr.mxu0 0.0
  %408 = vmatpush2.msra.mxu0 0.0
  %409 = vmatprep.mubr.f32.mxu0 0.0
  %410 = vmatmul.mubr.f32.gmra.mxu0 %v340
  %v411 = vpop.f32.mrf.mxu0
  %v412 = vadd.f32 %v337, %v411
  %v413 = vpop.f32.mrf.mxu0
  %414 = vmatprep.mubr.f32.mxu0 0.0
  %415 = vmatmul.mubr.f32.gmra.mxu0 %v343
  %v416 = vpop.f32.mrf.mxu0
  %v417 = vadd.f32 %v337, %v416
  %v418 = vpop.f32.mrf.mxu0
  %419 = vdwg.mxu0
  %v422 = vunpack.c.l.s4 1966171168
  %v423 = vunpack.c.0.s8 %v422
  %v424 = vlaneseq
  %v425 = vshrl.u32 %v424, 7
  %v426 = vsub.s32 %v423, %v425
  %v427 = vrot.slane %v144, %v426
  %v428 = vcombine.high %v427, %v427
  %v430 = vunpack.c.l.s4 1966171168
  %v431 = vunpack.c.0.s8 %v430
  %v432 = vlaneseq
  %v433 = vshrl.u32 %v432, 7
  %v434 = vsub.s32 %v431, %v433
  %v435 = vrot.slane %v427, %v434
  %v437 = vunpack.c.l.s4 1966171168
  %v438 = vunpack.c.0.s8 %v437
  %v439 = vlaneseq
  %v440 = vshrl.u32 %v439, 7
  %v441 = vsub.s32 %v438, %v440
  %v442 = vrot.slane %v428, %v441
  %v443 = vlaneseq
  %v444 = vshrl.u32 %v443, 7
  %v445 = vsub.s32 0, %v444
  %v446 = vrot.slane %v435, %v445
  %v447 = vlaneseq
  %v448 = vshrl.u32 %v447, 7
  %v449 = vsub.s32 0, %v448
  %v450 = vrot.slane %v442, %v449
  %v453 = vadd.f32 %v412, %v446
  %v454 = vadd.f32 %v417, %v450
  %v455 = vxor.u32 %v453, 2147483648
  %v456 = vxor.u32 %v454, 2147483648
  %v457 = vmul.f32 %v455, 1.442695
  %v458 = vpow.pop %v457
  %v459 = vmul.f32 %v456, 1.442695
  %v460 = vpow.pop %v459
  %v461 = vadd.f32 %v458, 1.0
  %v462 = vadd.f32 %v460, 1.0
  %v463 = vrcp.pop %v461
  %v464 = vmul.f32 1.0, %v463
  %v465 = vrcp.pop %v462
  %v466 = vmul.f32 1.0, %v465
  %v467 = vld [vmem:[%s9] sm:$0x1]
  %v469 = vlaneseq
  %v470 = vshrl.u32 %v469, 7
  %v471 = vsub.s32 0, %v470
  %v472 = vrot.slane %v467, %v471
  %v474 = vmul.f32 %v464, %v472
  %v475 = vmul.f32 %v466, %v472
  %v476 = vsel %vm40, %v474, 0.0
  %477 = vadd.xlane.f32.xlu0 %v476
  %v478 = vpop.xlane.xlu0 %477
  %v479 = vsel %vm40, %v475, 0.0
  %480 = vadd.xlane.f32.xlu0 %v479
  %v481 = vpop.xlane.xlu0 %480
  %v482 = vmul.f32 %v478, %v35
  %v483 = vmul.f32 %v481, %v36
  %v484 = vsel %vm40, %v482, 0.0
  %v485 = vrot.slane %v484, 4
  %v486 = vadd.f32 %v484, %v485
  %v487 = vrot.slane %v486, 2
  %v488 = vadd.f32 %v486, %v487
  %v489 = vrot.slane %v488, 1
  %v490 = vadd.f32 %v488, %v489
  %v491 = vsel %vm40, %v483, 0.0
  %v492 = vrot.slane %v491, 4
  %v493 = vadd.f32 %v491, %v492
  %v494 = vrot.slane %v493, 2
  %v495 = vadd.f32 %v493, %v494
  %v496 = vrot.slane %v495, 1
  %v497 = vadd.f32 %v495, %v496
  %v500 = vsel %vm73, %v497, %v490
  %vm502 = vcmask 254976
  %503 = vst.msk [vmem:[%s10] sm:$0x3] %vm502, %v500
  // Predicated region
  $region42: #{msthn_forward.11} parent=0 // pred_check
    _
  $region43: #{msthn_forward.11} parent=0 // pred_check_branch
    %505 = sbr.rel (0) target = $region45
  $region44: #{msthn_forward.11} parent=0 // pred_region
    _
  $region45: #{msthn_forward.11} parent=0 // pred_fallthru
    _
  // Predicated region
  $region46: #{msthn_forward.11} parent=0 // pred_check
    _
  $region47: #{msthn_forward.11} parent=0 // pred_check_branch
    %507 = sbr.rel (0) target = $region49
  $region48: #{msthn_forward.11} parent=0 // pred_region
    _
  $region49: #{msthn_forward.11} parent=0 // pred_fallthru
    _

</llo_original>
